<compile_context>
chip_gen: v7x
topology: tpu7x:2x2x1
jax: 0.10.0
libtpu: 0.0.40
codegen_flags: <defaults>
</compile_context>

<pallas_src>
import math
import functools

import numpy as np
import jax
import jax.numpy as jnp
from jax.experimental import pallas as pl
from jax.experimental.pallas import tpu as pltpu


NUM_CLASSES = 10
LOGITS_PAD = 128          # lane-dense logits slab; real logits = first NUM_CLASSES lanes
_SQRT_HALF = 1.0 / math.sqrt(2.0)
_MAX_BATCH_TILE = 512     # rows per grid step; sized for v7x 32 MiB scoped VMEM w/ 2x buffering


def _gelu_exact_f32(y):
    # exact (erf-based) GELU, matching nn.GELU() default; f32 math (v5e-safe VPU path).
    return 0.5 * y * (1.0 + jax.lax.erf(y * _SQRT_HALF))


# ---------------------------------------------------------------------------
# Fused kernel: 3x (Linear -> GELU -> folded BN) -> Linear -> ReLU, one batch tile
# ---------------------------------------------------------------------------

def _mlp_fused_kernel(*refs, n_blocks):
    # inputs : x_tile, then per-block (w, packed[b;scale;shift]) * n_blocks, then w_out, b_out
    # outputs: per-block activation tiles (bf16) * n_blocks, then padded logits tile (f32)
    x_ref = refs[0]
    idx = 1
    blocks = []
    for _ in range(n_blocks):
        blocks.append((refs[idx], refs[idx + 1]))
        idx += 2
    w_out_ref, b_out_ref = refs[idx], refs[idx + 1]
    idx += 2
    block_out_refs = refs[idx:idx + n_blocks]
    logits_ref = refs[idx + n_blocks]

    x = x_ref[...]  # f32 activations held in-kernel between layers
    for (w_ref, bss_ref), o_ref in zip(blocks, block_out_refs):
        # bf16 MXU operands, f32 accumulation, f32 epilogue.
        y = jnp.dot(x.astype(jnp.bfloat16), w_ref[...],
                    preferred_element_type=jnp.float32)
        bss = bss_ref[...]                       # (3, N): [bias; bn_scale; bn_shift]
        y = y + bss[0:1, :]
        y = _gelu_exact_f32(y)
        y = y * bss[1:2, :] + bss[2:3, :]        # folded eval-mode BatchNorm1d
        o_ref[...] = y.astype(o_ref.dtype)       # bf16 writeback (halved bytes)
        x = y

    # TODO(synk): Dropout(p=0.2) is stochastic in train mode; eval-mode identity here.
    y = jnp.dot(x.astype(jnp.bfloat16), w_out_ref[...],
                preferred_element_type=jnp.float32)
    y = y + b_out_ref[...]
    logits_ref[...] = jnp.maximum(y, 0.0)        # lane-dense 128-wide store


# ---------------------------------------------------------------------------
# Single-jit wrapper around one batch-tiled pallas_call
# ---------------------------------------------------------------------------

@jax.jit
def mlp_forward(x, block_params, out_params):
    n_blocks = len(block_params)
    B, D_in = x.shape

    # Batch tiling: single tile for small B; <=512-row tiles (multiple of 8) otherwise.
    if B <= _MAX_BATCH_TILE:
        b_tile = B
        b_pad = B
    else:
        b_tile = _MAX_BATCH_TILE
        b_pad = ((B + b_tile - 1) // b_tile) * b_tile
    if b_pad != B:
        x = jnp.pad(x, ((0, b_pad - B), (0, 0)))
    num_tiles = b_pad // b_tile

    inputs = [x]
    in_specs = [pl.BlockSpec((b_tile, D_in), lambda i: (i, 0))]
    out_shapes = []
    out_specs = []

    flops = 0
    transcendentals = 0
    bytes_accessed = b_pad * D_in * x.dtype.itemsize

    for (w, bss) in block_params:
        K, N = w.shape
        inputs += [w, bss]
        # weights / packed vectors: same block every grid step => stay VMEM-resident
        in_specs += [pl.BlockSpec((K, N), lambda i: (0, 0)),
                     pl.BlockSpec((3, N), lambda i: (0, 0))]
        out_shapes.append(jax.ShapeDtypeStruct((b_pad, N), jnp.bfloat16))
        out_specs.append(pl.BlockSpec((b_tile, N), lambda i: (i, 0)))
        flops += 2 * b_pad * K * N
        transcendentals += b_pad * N            # one erf per activation
        bytes_accessed += (w.size * w.dtype.itemsize + bss.size * 4 + b_pad * N * 2)

    w_out, b_out = out_params
    Ko, No = w_out.shape
    inputs += [w_out, b_out]
    in_specs += [pl.BlockSpec((Ko, No), lambda i: (0, 0)),
                 pl.BlockSpec((1, No), lambda i: (0, 0))]
    out_shapes.append(jax.ShapeDtypeStruct((b_pad, No), jnp.float32))
    out_specs.append(pl.BlockSpec((b_tile, No), lambda i: (i, 0)))
    flops += 2 * b_pad * Ko * No
    bytes_accessed += w_out.size * w_out.dtype.itemsize + b_out.size * 4 + b_pad * No * 4

    outs = pl.pallas_call(
        functools.partial(_mlp_fused_kernel, n_blocks=n_blocks),
        grid=(num_tiles,),
        out_shape=tuple(out_shapes),
        in_specs=in_specs,
        out_specs=tuple(out_specs),
        compiler_params=pltpu.CompilerParams(
            dimension_semantics=("parallel",)),   # v7x megacore over batch tiles
        cost_estimate=pl.CostEstimate(flops=flops,
                                      transcendentals=transcendentals,
                                      bytes_accessed=bytes_accessed),
    )(*inputs)

    block_outs = [o[:B] for o in outs[:-1]]
    logits = outs[-1][:B, :NUM_CLASSES]     # slice lane-dense slab back to 10 classes
    block_outs.append(logits)               # detached branch is numerically identical
    return logits, block_outs


# ---------------------------------------------------------------------------
# Parameter construction (deterministic, mimics PyTorch default Linear init)
# ---------------------------------------------------------------------------

def init_block(key, in_f, out_f, affine=True, eps=1e-5):
    kw, kb = jax.random.split(key)
    bound = 1.0 / math.sqrt(in_f)
    # stored already transposed: (in_f, out_f); bf16 for the MXU
    w = jax.random.uniform(kw, (in_f, out_f), jnp.float32, -bound, bound)
    b = jax.random.uniform(kb, (out_f,), jnp.float32, -bound, bound)
    # eval-mode BatchNorm1d running stats folded to per-feature scale/shift
    running_mean = jnp.zeros((out_f,), jnp.float32)
    running_var = jnp.ones((out_f,), jnp.float32)
    gamma = jnp.ones((out_f,), jnp.float32)     # identical whether affine or not (init values)
    beta = jnp.zeros((out_f,), jnp.float32)
    scale = gamma * jax.lax.rsqrt(running_var + eps)
    shift = beta - running_mean * scale
    bss = jnp.stack([b, scale, shift], axis=0)  # packed (3, out_f): single DMA descriptor
    return w.astype(jnp.bfloat16), bss


def init_output(key, in_f, out_f, pad_out):
    kw, kb = jax.random.split(key)
    bound = 1.0 / math.sqrt(in_f)
    w = jax.random.uniform(kw, (in_f, out_f), jnp.float32, -bound, bound)
    b = jax.random.uniform(kb, (1, out_f), jnp.float32, -bound, bound)
    if pad_out > out_f:
        # zero-pad output features so the final store is lane-dense (128-wide)
        w = jnp.pad(w, ((0, 0), (0, pad_out - out_f)))
        b = jnp.pad(b, ((0, 0), (0, pad_out - out_f)))
    return w.astype(jnp.bfloat16), b


def build_params(key, units, num_classes=NUM_CLASSES, affine=True):
    keys = jax.random.split(key, len(units))    # len(units)-1 blocks + output layer
    blocks = tuple(init_block(keys[i], units[i], units[i + 1], affine=affine)
                   for i in range(len(units) - 1))
    out = init_output(keys[-1], units[-1], num_classes, LOGITS_PAD)
    return blocks, out


# ---------------------------------------------------------------------------
# Pure-JAX reference (same bf16-operand / f32-accumulation recipe) for sanity check
# ---------------------------------------------------------------------------

def mlp_reference(x, block_params, out_params):
    h = x
    for (w, bss) in block_params:
        y = jnp.dot(h.astype(jnp.bfloat16), w, preferred_element_type=jnp.float32)
        y = y + bss[0:1]
        y = _gelu_exact_f32(y)
        y = y * bss[1:2] + bss[2:3]
        h = y
    w_out, b_out = out_params
    y = jnp.dot(h.astype(jnp.bfloat16), w_out, preferred_element_type=jnp.float32) + b_out
    return jnp.maximum(y, 0.0)[:, :NUM_CLASSES]


# ---------------------------------------------------------------------------
# Main
# ---------------------------------------------------------------------------

if __name__ == "__main__":
    key = jax.random.PRNGKey(0)
    kx, kp = jax.random.split(key)

    # mnist config from the module: units = [784, 256, 128, 128], output -> 10
    units = [784, 256, 128, 128]
    batch = 8
    x = jax.random.normal(kx, (batch, units[0]), jnp.float32)

    block_params, out_params = build_params(kp, units, num_classes=NUM_CLASSES, affine=True)

    logits, outputs = mlp_forward(x, block_params, out_params)
    jax.block_until_ready(logits)
    for o in outputs:
        jax.block_until_ready(o)

    assert logits.shape == (batch, NUM_CLASSES)
    assert len(outputs) == len(units)  # 3 block outputs + final detached-output
    for (w, _), o in zip(block_params, outputs[:-1]):
        assert o.shape == (batch, w.shape[1])

    # loose sanity check against the pure-JAX reference (bf16-operand tolerance)
    ref_logits = jax.jit(mlp_reference)(x, block_params, out_params)
    jax.block_until_ready(ref_logits)
    assert np.allclose(np.asarray(logits), np.asarray(ref_logits), rtol=2e-2, atol=2e-2)

    print("KERNEL_OK")
</pallas_src>

<mosaic_0001>
module attributes {stable_mosaic.version = 11 : i64} {
  func.func @_mlp_fused_kernel(%arg0: i32, %arg1: memref<8x784xf32, #tpu.memory_space<vmem>>, %arg2: memref<784x256xbf16, #tpu.memory_space<vmem>>, %arg3: memref<3x256xf32, #tpu.memory_space<vmem>>, %arg4: memref<256x128xbf16, #tpu.memory_space<vmem>>, %arg5: memref<3x128xf32, #tpu.memory_space<vmem>>, %arg6: memref<128x128xbf16, #tpu.memory_space<vmem>>, %arg7: memref<3x128xf32, #tpu.memory_space<vmem>>, %arg8: memref<128x128xbf16, #tpu.memory_space<vmem>>, %arg9: memref<1x128xf32, #tpu.memory_space<vmem>>, %arg10: memref<8x256xbf16, #tpu.memory_space<vmem>>, %arg11: memref<8x128xbf16, #tpu.memory_space<vmem>>, %arg12: memref<8x128xbf16, #tpu.memory_space<vmem>>, %arg13: memref<8x128xf32, #tpu.memory_space<vmem>>) attributes {dimension_semantics = [#tpu.dimension_semantics<parallel>], iteration_bounds = array<i64: 1>, scalar_prefetch = 0 : i64, scratch_operands = 0 : i64, tpu.core_type = #tpu.core_type<tc>, window_params = [{transform_indices = @transform_0, window_bounds = array<i64: 8, 784>}, {pipeline_mode = #tpu.pipeline_mode<synchronous>, transform_indices = @transform_1, window_bounds = array<i64: 784, 256>}, {pipeline_mode = #tpu.pipeline_mode<synchronous>, transform_indices = @transform_2, window_bounds = array<i64: 3, 256>}, {pipeline_mode = #tpu.pipeline_mode<synchronous>, transform_indices = @transform_3, window_bounds = array<i64: 256, 128>}, {pipeline_mode = #tpu.pipeline_mode<synchronous>, transform_indices = @transform_4, window_bounds = array<i64: 3, 128>}, {pipeline_mode = #tpu.pipeline_mode<synchronous>, transform_indices = @transform_5, window_bounds = array<i64: 128, 128>}, {pipeline_mode = #tpu.pipeline_mode<synchronous>, transform_indices = @transform_6, window_bounds = array<i64: 3, 128>}, {pipeline_mode = #tpu.pipeline_mode<synchronous>, transform_indices = @transform_7, window_bounds = array<i64: 128, 128>}, {pipeline_mode = #tpu.pipeline_mode<synchronous>, transform_indices = @transform_8, window_bounds = array<i64: 1, 128>}, {transform_indices = @transform_9, window_bounds = array<i64: 8, 256>}, {transform_indices = @transform_10, window_bounds = array<i64: 8, 128>}, {transform_indices = @transform_11, window_bounds = array<i64: 8, 128>}, {transform_indices = @transform_12, window_bounds = array<i64: 8, 128>}]} {
    %c0 = arith.constant 0 : index
    %c0_0 = arith.constant 0 : index
    %0 = vector.load %arg1[%c0, %c0_0] : memref<8x784xf32, #tpu.memory_space<vmem>>, vector<8x784xf32>
    %1 = arith.truncf %0 : vector<8x784xf32> to vector<8x784xbf16>
    %c0_1 = arith.constant 0 : index
    %c0_2 = arith.constant 0 : index
    %2 = vector.load %arg2[%c0_1, %c0_2] : memref<784x256xbf16, #tpu.memory_space<vmem>>, vector<784x256xbf16>
    %cst = arith.constant dense<0.000000e+00> : vector<8x256xf32>
    %3 = tpu.matmul %1, %2, %cst {dimension_numbers = #tpu.dot_dimension_numbers<[1], [0], [0], [1], [0, 0, 1, 1], [], []>} : vector<8x784xbf16>, vector<784x256xbf16>, vector<8x256xf32> -> vector<8x256xf32>
    %c0_3 = arith.constant 0 : index
    %c0_4 = arith.constant 0 : index
    %4 = vector.load %arg3[%c0_3, %c0_4] : memref<3x256xf32, #tpu.memory_space<vmem>>, vector<3x256xf32>
    %5 = vector.extract_strided_slice %4 {offsets = [0, 0], sizes = [1, 256], strides = [1, 1]} : vector<3x256xf32> to vector<1x256xf32>
    %6 = vector.broadcast %5 : vector<1x256xf32> to vector<8x256xf32>
    %7 = arith.addf %3, %6 : vector<8x256xf32>
    %cst_5 = arith.constant 5.000000e-01 : f32
    %8 = vector.broadcast %cst_5 : f32 to vector<8x256xf32>
    %9 = arith.mulf %8, %7 : vector<8x256xf32>
    %cst_6 = arith.constant 0.707106769 : f32
    %10 = vector.broadcast %cst_6 : f32 to vector<8x256xf32>
    %11 = arith.mulf %7, %10 : vector<8x256xf32>
    %12 = math.erf %11 : vector<8x256xf32>
    %cst_7 = arith.constant 1.000000e+00 : f32
    %13 = vector.broadcast %cst_7 : f32 to vector<8x256xf32>
    %14 = arith.addf %13, %12 : vector<8x256xf32>
    %15 = arith.mulf %9, %14 : vector<8x256xf32>
    %16 = vector.extract_strided_slice %4 {offsets = [1, 0], sizes = [1, 256], strides = [1, 1]} : vector<3x256xf32> to vector<1x256xf32>
    %17 = vector.broadcast %16 : vector<1x256xf32> to vector<8x256xf32>
    %18 = arith.mulf %15, %17 : vector<8x256xf32>
    %19 = vector.extract_strided_slice %4 {offsets = [2, 0], sizes = [1, 256], strides = [1, 1]} : vector<3x256xf32> to vector<1x256xf32>
    %20 = vector.broadcast %19 : vector<1x256xf32> to vector<8x256xf32>
    %21 = arith.addf %18, %20 : vector<8x256xf32>
    %22 = arith.truncf %21 : vector<8x256xf32> to vector<8x256xbf16>
    %c0_8 = arith.constant 0 : index
    %c0_9 = arith.constant 0 : index
    %23 = vector.load %arg10[%c0_8, %c0_9] : memref<8x256xbf16, #tpu.memory_space<vmem>>, vector<8x256xbf16>
    tpu.vector_store %arg10[%c0_8, %c0_9], %22 {strides = array<i32>} : memref<8x256xbf16, #tpu.memory_space<vmem>>, vector<8x256xbf16>,
    %24 = arith.truncf %21 : vector<8x256xf32> to vector<8x256xbf16>
    %c0_10 = arith.constant 0 : index
    %c0_11 = arith.constant 0 : index
    %25 = vector.load %arg4[%c0_10, %c0_11] : memref<256x128xbf16, #tpu.memory_space<vmem>>, vector<256x128xbf16>
    %cst_12 = arith.constant dense<0.000000e+00> : vector<8x128xf32>
    %26 = tpu.matmul %24, %25, %cst_12 {dimension_numbers = #tpu.dot_dimension_numbers<[1], [0], [0], [1], [0, 0, 1, 1], [], []>} : vector<8x256xbf16>, vector<256x128xbf16>, vector<8x128xf32> -> vector<8x128xf32>
    %c0_13 = arith.constant 0 : index
    %c0_14 = arith.constant 0 : index
    %27 = vector.load %arg5[%c0_13, %c0_14] : memref<3x128xf32, #tpu.memory_space<vmem>>, vector<3x128xf32>
    %28 = vector.extract_strided_slice %27 {offsets = [0, 0], sizes = [1, 128], strides = [1, 1]} : vector<3x128xf32> to vector<1x128xf32>
    %29 = vector.broadcast %28 : vector<1x128xf32> to vector<8x128xf32>
    %30 = arith.addf %26, %29 : vector<8x128xf32>
    %cst_15 = arith.constant 5.000000e-01 : f32
    %31 = vector.broadcast %cst_15 : f32 to vector<8x128xf32>
    %32 = arith.mulf %31, %30 : vector<8x128xf32>
    %cst_16 = arith.constant 0.707106769 : f32
    %33 = vector.broadcast %cst_16 : f32 to vector<8x128xf32>
    %34 = arith.mulf %30, %33 : vector<8x128xf32>
    %35 = math.erf %34 : vector<8x128xf32>
    %cst_17 = arith.constant 1.000000e+00 : f32
    %36 = vector.broadcast %cst_17 : f32 to vector<8x128xf32>
    %37 = arith.addf %36, %35 : vector<8x128xf32>
    %38 = arith.mulf %32, %37 : vector<8x128xf32>
    %39 = vector.extract_strided_slice %27 {offsets = [1, 0], sizes = [1, 128], strides = [1, 1]} : vector<3x128xf32> to vector<1x128xf32>
    %40 = vector.broadcast %39 : vector<1x128xf32> to vector<8x128xf32>
    %41 = arith.mulf %38, %40 : vector<8x128xf32>
    %42 = vector.extract_strided_slice %27 {offsets = [2, 0], sizes = [1, 128], strides = [1, 1]} : vector<3x128xf32> to vector<1x128xf32>
    %43 = vector.broadcast %42 : vector<1x128xf32> to vector<8x128xf32>
    %44 = arith.addf %41, %43 : vector<8x128xf32>
    %45 = arith.truncf %44 : vector<8x128xf32> to vector<8x128xbf16>
    %c0_18 = arith.constant 0 : index
    %c0_19 = arith.constant 0 : index
    %46 = vector.load %arg11[%c0_18, %c0_19] : memref<8x128xbf16, #tpu.memory_space<vmem>>, vector<8x128xbf16>
    tpu.vector_store %arg11[%c0_18, %c0_19], %45 {strides = array<i32>} : memref<8x128xbf16, #tpu.memory_space<vmem>>, vector<8x128xbf16>,
    %47 = arith.truncf %44 : vector<8x128xf32> to vector<8x128xbf16>
    %c0_20 = arith.constant 0 : index
    %c0_21 = arith.constant 0 : index
    %48 = vector.load %arg6[%c0_20, %c0_21] : memref<128x128xbf16, #tpu.memory_space<vmem>>, vector<128x128xbf16>
    %cst_22 = arith.constant dense<0.000000e+00> : vector<8x128xf32>
    %49 = tpu.matmul %47, %48, %cst_22 {dimension_numbers = #tpu.dot_dimension_numbers<[1], [0], [0], [1], [0, 0, 1, 1], [], []>} : vector<8x128xbf16>, vector<128x128xbf16>, vector<8x128xf32> -> vector<8x128xf32>
    %c0_23 = arith.constant 0 : index
    %c0_24 = arith.constant 0 : index
    %50 = vector.load %arg7[%c0_23, %c0_24] : memref<3x128xf32, #tpu.memory_space<vmem>>, vector<3x128xf32>
    %51 = vector.extract_strided_slice %50 {offsets = [0, 0], sizes = [1, 128], strides = [1, 1]} : vector<3x128xf32> to vector<1x128xf32>
    %52 = vector.broadcast %51 : vector<1x128xf32> to vector<8x128xf32>
    %53 = arith.addf %49, %52 : vector<8x128xf32>
    %cst_25 = arith.constant 5.000000e-01 : f32
    %54 = vector.broadcast %cst_25 : f32 to vector<8x128xf32>
    %55 = arith.mulf %54, %53 : vector<8x128xf32>
    %cst_26 = arith.constant 0.707106769 : f32
    %56 = vector.broadcast %cst_26 : f32 to vector<8x128xf32>
    %57 = arith.mulf %53, %56 : vector<8x128xf32>
    %58 = math.erf %57 : vector<8x128xf32>
    %cst_27 = arith.constant 1.000000e+00 : f32
    %59 = vector.broadcast %cst_27 : f32 to vector<8x128xf32>
    %60 = arith.addf %59, %58 : vector<8x128xf32>
    %61 = arith.mulf %55, %60 : vector<8x128xf32>
    %62 = vector.extract_strided_slice %50 {offsets = [1, 0], sizes = [1, 128], strides = [1, 1]} : vector<3x128xf32> to vector<1x128xf32>
    %63 = vector.broadcast %62 : vector<1x128xf32> to vector<8x128xf32>
    %64 = arith.mulf %61, %63 : vector<8x128xf32>
    %65 = vector.extract_strided_slice %50 {offsets = [2, 0], sizes = [1, 128], strides = [1, 1]} : vector<3x128xf32> to vector<1x128xf32>
    %66 = vector.broadcast %65 : vector<1x128xf32> to vector<8x128xf32>
    %67 = arith.addf %64, %66 : vector<8x128xf32>
    %68 = arith.truncf %67 : vector<8x128xf32> to vector<8x128xbf16>
    %c0_28 = arith.constant 0 : index
    %c0_29 = arith.constant 0 : index
    %69 = vector.load %arg12[%c0_28, %c0_29] : memref<8x128xbf16, #tpu.memory_space<vmem>>, vector<8x128xbf16>
    tpu.vector_store %arg12[%c0_28, %c0_29], %68 {strides = array<i32>} : memref<8x128xbf16, #tpu.memory_space<vmem>>, vector<8x128xbf16>,
    %70 = arith.truncf %67 : vector<8x128xf32> to vector<8x128xbf16>
    %c0_30 = arith.constant 0 : index
    %c0_31 = arith.constant 0 : index
    %71 = vector.load %arg8[%c0_30, %c0_31] : memref<128x128xbf16, #tpu.memory_space<vmem>>, vector<128x128xbf16>
    %cst_32 = arith.constant dense<0.000000e+00> : vector<8x128xf32>
    %72 = tpu.matmul %70, %71, %cst_32 {dimension_numbers = #tpu.dot_dimension_numbers<[1], [0], [0], [1], [0, 0, 1, 1], [], []>} : vector<8x128xbf16>, vector<128x128xbf16>, vector<8x128xf32> -> vector<8x128xf32>
    %c0_33 = arith.constant 0 : index
    %c0_34 = arith.constant 0 : index
    %73 = vector.load %arg9[%c0_33, %c0_34] : memref<1x128xf32, #tpu.memory_space<vmem>>, vector<1x128xf32>
    %74 = vector.broadcast %73 : vector<1x128xf32> to vector<8x128xf32>
    %75 = arith.addf %72, %74 : vector<8x128xf32>
    %cst_35 = arith.constant 0.000000e+00 : f32
    %76 = vector.broadcast %cst_35 : f32 to vector<8x128xf32>
    %77 = arith.maximumf %75, %76 : vector<8x128xf32>
    %c0_36 = arith.constant 0 : index
    %c0_37 = arith.constant 0 : index
    %78 = vector.load %arg13[%c0_36, %c0_37] : memref<8x128xf32, #tpu.memory_space<vmem>>, vector<8x128xf32>
    tpu.vector_store %arg13[%c0_36, %c0_37], %77 {strides = array<i32>} : memref<8x128xf32, #tpu.memory_space<vmem>>, vector<8x128xf32>,
    return
  }
  func.func @transform_0(%arg0: i32) -> (i32, i32) {
    %c0_i32 = arith.constant 0 : i32
    %c0_i32_0 = arith.constant 0 : i32
    return %arg0, %c0_i32 : i32, i32
  }
  func.func @transform_1(%arg0: i32) -> (i32, i32) {
    %c0_i32 = arith.constant 0 : i32
    %c0_i32_0 = arith.constant 0 : i32
    %c0_i32_1 = arith.constant 0 : i32
    return %c0_i32, %c0_i32_0 : i32, i32
  }
  func.func @transform_2(%arg0: i32) -> (i32, i32) {
    %c0_i32 = arith.constant 0 : i32
    %c0_i32_0 = arith.constant 0 : i32
    %c0_i32_1 = arith.constant 0 : i32
    return %c0_i32, %c0_i32_0 : i32, i32
  }
  func.func @transform_3(%arg0: i32) -> (i32, i32) {
    %c0_i32 = arith.constant 0 : i32
    %c0_i32_0 = arith.constant 0 : i32
    %c0_i32_1 = arith.constant 0 : i32
    return %c0_i32, %c0_i32_0 : i32, i32
  }
  func.func @transform_4(%arg0: i32) -> (i32, i32) {
    %c0_i32 = arith.constant 0 : i32
    %c0_i32_0 = arith.constant 0 : i32
    %c0_i32_1 = arith.constant 0 : i32
    return %c0_i32, %c0_i32_0 : i32, i32
  }
  func.func @transform_5(%arg0: i32) -> (i32, i32) {
    %c0_i32 = arith.constant 0 : i32
    %c0_i32_0 = arith.constant 0 : i32
    %c0_i32_1 = arith.constant 0 : i32
    return %c0_i32, %c0_i32_0 : i32, i32
  }
  func.func @transform_6(%arg0: i32) -> (i32, i32) {
    %c0_i32 = arith.constant 0 : i32
    %c0_i32_0 = arith.constant 0 : i32
    %c0_i32_1 = arith.constant 0 : i32
    return %c0_i32, %c0_i32_0 : i32, i32
  }
  func.func @transform_7(%arg0: i32) -> (i32, i32) {
    %c0_i32 = arith.constant 0 : i32
    %c0_i32_0 = arith.constant 0 : i32
    %c0_i32_1 = arith.constant 0 : i32
    return %c0_i32, %c0_i32_0 : i32, i32
  }
  func.func @transform_8(%arg0: i32) -> (i32, i32) {
    %c0_i32 = arith.constant 0 : i32
    %c0_i32_0 = arith.constant 0 : i32
    %c0_i32_1 = arith.constant 0 : i32
    return %c0_i32, %c0_i32_0 : i32, i32
  }
  func.func @transform_9(%arg0: i32) -> (i32, i32) {
    %c0_i32 = arith.constant 0 : i32
    %c0_i32_0 = arith.constant 0 : i32
    return %arg0, %c0_i32 : i32, i32
  }
  func.func @transform_10(%arg0: i32) -> (i32, i32) {
    %c0_i32 = arith.constant 0 : i32
    %c0_i32_0 = arith.constant 0 : i32
    return %arg0, %c0_i32 : i32, i32
  }
  func.func @transform_11(%arg0: i32) -> (i32, i32) {
    %c0_i32 = arith.constant 0 : i32
    %c0_i32_0 = arith.constant 0 : i32
    return %arg0, %c0_i32 : i32, i32
  }
  func.func @transform_12(%arg0: i32) -> (i32, i32) {
    %c0_i32 = arith.constant 0 : i32
    %c0_i32_0 = arith.constant 0 : i32
    return %arg0, %c0_i32 : i32, i32
  }
}

</mosaic_0001>

<llo_original>
// kernel: mlp_forward.1
$region0: #{mlp_forward.1}
  #allocation0 [shape = 'u32[]', space=smem, size = 0x4, offset = 0x4, fixed_abs, tag = 'smem constant byte address 0x4 - core index']
  #allocation1 [shape = 'u32[144,128]{1,0:T(1,128)}', space=vmem, size = 0x12000, scoped, tag = 'internal scratch']
  %s0 = inlined_call_operand.hbm [shape: f32[8,784], index: 0, kind: input, shape index: {}]
  %s1 = inlined_call_operand.hbm [shape: bf16[784,256], index: 1, kind: input, shape index: {}]
  %s2 = inlined_call_operand.hbm [shape: f32[3,256], index: 2, kind: input, shape index: {}]
  %s3 = inlined_call_operand.hbm [shape: bf16[256,128], index: 3, kind: input, shape index: {}]
  %s4 = inlined_call_operand.vmem [shape: f32[3,128], index: 4, kind: input, shape index: {}]
  %s5 = inlined_call_operand.hbm [shape: bf16[128,128], index: 5, kind: input, shape index: {}]
  %s6 = inlined_call_operand.vmem [shape: f32[3,128], index: 6, kind: input, shape index: {}]
  %s7 = inlined_call_operand.hbm [shape: bf16[128,128], index: 7, kind: input, shape index: {}]
  %s8 = inlined_call_operand.vmem [shape: f32[1,128], index: 8, kind: input, shape index: {}]
  %s9 = inlined_call_operand.hbm [shape: bf16[8,256], index: 9, kind: output, shape index: {0}]
  %s10 = inlined_call_operand.hbm [shape: bf16[8,128], index: 10, kind: output, shape index: {1}]
  %s11 = inlined_call_operand.hbm [shape: bf16[8,128], index: 11, kind: output, shape index: {2}]
  %s12 = inlined_call_operand.vmem [shape: f32[8,128], index: 12, kind: output, shape index: {3}]
  %13 = xla_tuple %s9, %s10, %s11, %s12
  %s14 = sld [smem:[#allocation0]]
  $region94: #{mlp_forward.1} parent=0
    _
  %s16 = ssub.s32 1, %s14
  %s17 = scalar_select 0, %s16, %s14
  $region1: #{mlp_forward.1} parent=0
    #allocation2 [shape = 'u8[28672]{0}', space=vmem, size = 0x7000, scoped, tag = 'input window, operand 0, single buffered']
    #allocation3 [shape = 's32[1]{0}', space=sflag, size = 0x4, scoped, tag = 'scoped memory for mlp_forward.1']
    #allocation4 [shape = 's32[1]{0}', space=sflag, size = 0x4, scoped, tag = 'scoped memory for mlp_forward.1']
    #allocation5 [shape = 'u8[401408]{0}', space=vmem, size = 0x62000, scoped, tag = 'input window, operand 1, single buffered']
    #allocation6 [shape = 's32[1]{0}', space=sflag, size = 0x4, scoped, tag = 'scoped memory for mlp_forward.1']
    #allocation7 [shape = 'u8[4096]{0}', space=vmem, size = 0x1000, scoped, tag = 'input window, operand 2, single buffered']
    #allocation8 [shape = 'u8[65536]{0}', space=vmem, size = 0x10000, scoped, tag = 'input window, operand 3, single buffered']
    #allocation9 [shape = 's32[1]{0}', space=sflag, size = 0x4, scoped, tag = 'scoped memory for mlp_forward.1']
    #allocation10 [shape = 'u8[32768]{0}', space=vmem, size = 0x8000, scoped, tag = 'input window, operand 5, single buffered']
    #allocation11 [shape = 'u8[32768]{0}', space=vmem, size = 0x8000, scoped, tag = 'input window, operand 7, single buffered']
    #allocation12 [shape = 's32[1]{0}', space=sflag, size = 0x4, scoped, tag = 'scoped memory for mlp_forward.1']
    #allocation13 [shape = 'u8[4096]{0}', space=vmem, size = 0x1000, scoped, tag = 'output window, operand 0, single buffered']
    #allocation14 [shape = 'u8[2048]{0}', space=vmem, size = 0x800, scoped, tag = 'output window, operand 1, single buffered']
    #allocation15 [shape = 's32[1]{0}', space=sflag, size = 0x4, scoped, tag = 'scoped memory for mlp_forward.1']
    #allocation16 [shape = 'u8[2048]{0}', space=vmem, size = 0x800, scoped, tag = 'output window, operand 2, single buffered']
    %18 = vsyncpa [#allocation3], 0
    %19 = vsyncpa [#allocation6], 0
    %20 = vsyncpa [#allocation9], 0
    %21 = vsyncpa [#allocation12], 0
    %22 = vsyncpa [#allocation4], 0
    %23 = vsyncpa [#allocation15], 0
    // Predicated region
    $region2: #{mlp_forward.1} parent=1 // pred_check
      _
    $region3: #{mlp_forward.1} parent=1 // pred_check_branch
      %25 = sbr.rel (0) target = $region5
    $region4: #{mlp_forward.1} parent=1 // pred_region
      %s27 = ssub.s32 896, 896
      %28 = vsyncadd [#allocation3], %s27
      %s30 = sshll.u32 [#allocation2], 4
      %s31 = int_to_ptr.vmem [resolvable:$true] %s30
      %33 = dma.hbm_to_vmem [thread:$0]  %s0, 896, %s31, [#allocation3]
    $region5: #{mlp_forward.1} parent=1 // pred_fallthru
      _
    // Predicated region
    $region6: #{mlp_forward.1} parent=1 // pred_check
      _
    $region7: #{mlp_forward.1} parent=1 // pred_check_branch
      %35 = sbr.rel (0) target = $region9
    $region8: #{mlp_forward.1} parent=1 // pred_region
      %s37 = ssub.s32 12544, 12544
      %38 = vsyncadd [#allocation6], %s37
      %s39 = sshll.u32 [#allocation5], 4
      %s40 = int_to_ptr.vmem [resolvable:$true] %s39
      %45 = dma.hbm_to_vmem [thread:$0]  %s1, 12544, %s40, [#allocation6], 128, 128, 8
    $region9: #{mlp_forward.1} parent=1 // pred_fallthru
      _
    // Predicated region
    $region10: #{mlp_forward.1} parent=1 // pred_check
      _
    $region11: #{mlp_forward.1} parent=1 // pred_check_branch
      %47 = sbr.rel (0) target = $region13
    $region12: #{mlp_forward.1} parent=1 // pred_region
      %s49 = ssub.s32 128, 128
      %50 = vsyncadd [#allocation6], %s49
      %s52 = sshll.u32 [#allocation7], 4
      %s53 = int_to_ptr.vmem [resolvable:$true] %s52
      %55 = dma.hbm_to_vmem [thread:$0]  %s2, 128, %s53, [#allocation6]
    $region13: #{mlp_forward.1} parent=1 // pred_fallthru
      _
    // Predicated region
    $region14: #{mlp_forward.1} parent=1 // pred_check
      _
    $region15: #{mlp_forward.1} parent=1 // pred_check_branch
      %57 = sbr.rel (0) target = $region17
    $region16: #{mlp_forward.1} parent=1 // pred_region
      %s59 = ssub.s32 2048, 2048
      %60 = vsyncadd [#allocation9], %s59
      %s61 = sshll.u32 [#allocation8], 4
      %s62 = int_to_ptr.vmem [resolvable:$true] %s61
      %67 = dma.hbm_to_vmem [thread:$0]  %s3, 2048, %s62, [#allocation9], 64, 64, 4
    $region17: #{mlp_forward.1} parent=1 // pred_fallthru
      _
    // Predicated region
    $region18: #{mlp_forward.1} parent=1 // pred_check
      _
    $region19: #{mlp_forward.1} parent=1 // pred_check_branch
      %69 = sbr.rel (0) target = $region21
    $region20: #{mlp_forward.1} parent=1 // pred_region
      _
    $region21: #{mlp_forward.1} parent=1 // pred_fallthru
      _
    // Predicated region
    $region22: #{mlp_forward.1} parent=1 // pred_check
      _
    $region23: #{mlp_forward.1} parent=1 // pred_check_branch
      %71 = sbr.rel (0) target = $region25
    $region24: #{mlp_forward.1} parent=1 // pred_region
      %s73 = ssub.s32 1024, 1024
      %74 = vsyncadd [#allocation9], %s73
      %s75 = sshll.u32 [#allocation10], 4
      %s76 = int_to_ptr.vmem [resolvable:$true] %s75
      %81 = dma.hbm_to_vmem [thread:$0]  %s5, 1024, %s76, [#allocation9], 64, 64, 4
    $region25: #{mlp_forward.1} parent=1 // pred_fallthru
      _
    // Predicated region
    $region26: #{mlp_forward.1} parent=1 // pred_check
      _
    $region27: #{mlp_forward.1} parent=1 // pred_check_branch
      %83 = sbr.rel (0) target = $region29
    $region28: #{mlp_forward.1} parent=1 // pred_region
      _
    $region29: #{mlp_forward.1} parent=1 // pred_fallthru
      _
    // Predicated region
    $region30: #{mlp_forward.1} parent=1 // pred_check
      _
    $region31: #{mlp_forward.1} parent=1 // pred_check_branch
      %85 = sbr.rel (0) target = $region33
    $region32: #{mlp_forward.1} parent=1 // pred_region
      %s87 = ssub.s32 1024, 1024
      %88 = vsyncadd [#allocation12], %s87
      %s89 = sshll.u32 [#allocation11], 4
      %s90 = int_to_ptr.vmem [resolvable:$true] %s89
      %95 = dma.hbm_to_vmem [thread:$0]  %s7, 1024, %s90, [#allocation12], 64, 64, 4
    $region33: #{mlp_forward.1} parent=1 // pred_fallthru
      _
    // Predicated region
    $region34: #{mlp_forward.1} parent=1 // pred_check
      _
    $region35: #{mlp_forward.1} parent=1 // pred_check_branch
      %97 = sbr.rel (0) target = $region37
    $region36: #{mlp_forward.1} parent=1 // pred_region
      _
    $region37: #{mlp_forward.1} parent=1 // pred_fallthru
      _
    // Predicated region
    $region38: #{mlp_forward.1} parent=1 // pred_check
      _
    $region39: #{mlp_forward.1} parent=1 // pred_check_branch
      %99 = sbr.rel (0) target = $region41
    $region40: #{mlp_forward.1} parent=1 // pred_region
      %100 = dma.done [#allocation3], 896
    $region41: #{mlp_forward.1} parent=1 // pred_fallthru
      _
    // Predicated region
    $region42: #{mlp_forward.1} parent=1 // pred_check
      _
    $region43: #{mlp_forward.1} parent=1 // pred_check_branch
      %102 = sbr.rel (0) target = $region45
    $region44: #{mlp_forward.1} parent=1 // pred_region
      %103 = dma.done [#allocation6], 12544
    $region45: #{mlp_forward.1} parent=1 // pred_fallthru
      _
    // Predicated region
    $region46: #{mlp_forward.1} parent=1 // pred_check
      _
    $region47: #{mlp_forward.1} parent=1 // pred_check_branch
      %105 = sbr.rel (0) target = $region49
    $region48: #{mlp_forward.1} parent=1 // pred_region
      %106 = dma.done [#allocation6], 128
    $region49: #{mlp_forward.1} parent=1 // pred_fallthru
      _
    // Predicated region
    $region50: #{mlp_forward.1} parent=1 // pred_check
      _
    $region51: #{mlp_forward.1} parent=1 // pred_check_branch
      %108 = sbr.rel (0) target = $region53
    $region52: #{mlp_forward.1} parent=1 // pred_region
      %109 = dma.done [#allocation9], 2048
    $region53: #{mlp_forward.1} parent=1 // pred_fallthru
      _
    // Predicated region
    $region54: #{mlp_forward.1} parent=1 // pred_check
      _
    $region55: #{mlp_forward.1} parent=1 // pred_check_branch
      %111 = sbr.rel (0) target = $region57
    $region56: #{mlp_forward.1} parent=1 // pred_region
      %112 = dma.done [#allocation9], 1024
    $region57: #{mlp_forward.1} parent=1 // pred_fallthru
      _
    // Predicated region
    $region58: #{mlp_forward.1} parent=1 // pred_check
      _
    $region59: #{mlp_forward.1} parent=1 // pred_check_branch
      %114 = sbr.rel (0) target = $region61
    $region60: #{mlp_forward.1} parent=1 // pred_region
      %115 = dma.done [#allocation12], 1024
    $region61: #{mlp_forward.1} parent=1 // pred_fallthru
      _
    %v117 = vld [vmem:[#allocation2] sm:$0xff]
    %v118 = vld [vmem:[#allocation2 + $0x8] sm:$0xff]
    %v119 = vld [vmem:[#allocation2 + $0x10] sm:$0xff]
    %v120 = vld [vmem:[#allocation2 + $0x18] sm:$0xff]
    %v121 = vld [vmem:[#allocation2 + $0x20] sm:$0xff]
    %v122 = vld [vmem:[#allocation2 + $0x28] sm:$0xff]
    %v123 = vld [vmem:[#allocation2 + $0x30] sm:$0xff]
    %v124 = vpack.c.bf16 %v117, %v117
    %v125 = vpack.c.bf16 %v118, %v118
    %v126 = vpack.c.bf16 %v119, %v119
    %v127 = vpack.c.bf16 %v120, %v120
    %v128 = vpack.c.bf16 %v121, %v121
    %v129 = vpack.c.bf16 %v122, %v122
    %v130 = vpack.c.bf16 %v123, %v123
    %v131 = vld [vmem:[#allocation5] sm:$0xff]
    %v132 = vld [vmem:[#allocation5 + $0x8] sm:$0xff]
    %v133 = vld [vmem:[#allocation5 + $0x10] sm:$0xff]
    %v134 = vld [vmem:[#allocation5 + $0x18] sm:$0xff]
    %v135 = vld [vmem:[#allocation5 + $0x20] sm:$0xff]
    %v136 = vld [vmem:[#allocation5 + $0x28] sm:$0xff]
    %v137 = vld [vmem:[#allocation5 + $0x30] sm:$0xff]
    %v138 = vld [vmem:[#allocation5 + $0x38] sm:$0xff]
    %v139 = vld [vmem:[#allocation5 + $0x40] sm:$0xff]
    %v140 = vld [vmem:[#allocation5 + $0x48] sm:$0xff]
    %v141 = vld [vmem:[#allocation5 + $0x50] sm:$0xff]
    %v142 = vld [vmem:[#allocation5 + $0x58] sm:$0xff]
    %v143 = vld [vmem:[#allocation5 + $0x60] sm:$0xff]
    %v144 = vld [vmem:[#allocation5 + $0x68] sm:$0xff]
    %v145 = vld [vmem:[#allocation5 + $0x70] sm:$0xff]
    %v146 = vld [vmem:[#allocation5 + $0x78] sm:$0xff]
    %v147 = vld [vmem:[#allocation5 + $0x80] sm:$0xff]
    %v148 = vld [vmem:[#allocation5 + $0x88] sm:$0xff]
    %v149 = vld [vmem:[#allocation5 + $0x90] sm:$0xff]
    %v150 = vld [vmem:[#allocation5 + $0x98] sm:$0xff]
    %v151 = vld [vmem:[#allocation5 + $0xa0] sm:$0xff]
    %v152 = vld [vmem:[#allocation5 + $0xa8] sm:$0xff]
    %v153 = vld [vmem:[#allocation5 + $0xb0] sm:$0xff]
    %v154 = vld [vmem:[#allocation5 + $0xb8] sm:$0xff]
    %v155 = vld [vmem:[#allocation5 + $0xc0] sm:$0xff]
    %v156 = vld [vmem:[#allocation5 + $0xc8] sm:$0xff]
    %v157 = vld [vmem:[#allocation5 + $0xd0] sm:$0xff]
    %v158 = vld [vmem:[#allocation5 + $0xd8] sm:$0xff]
    %v159 = vld [vmem:[#allocation5 + $0xe0] sm:$0xff]
    %v160 = vld [vmem:[#allocation5 + $0xe8] sm:$0xff]
    %v161 = vld [vmem:[#allocation5 + $0xf0] sm:$0xff]
    %v162 = vld [vmem:[#allocation5 + $0xf8] sm:$0xff]
    %v163 = vld [vmem:[#allocation5 + $0x100] sm:$0xff]
    %v164 = vld [vmem:[#allocation5 + $0x108] sm:$0xff]
    %v165 = vld [vmem:[#allocation5 + $0x110] sm:$0xff]
    %v166 = vld [vmem:[#allocation5 + $0x118] sm:$0xff]
    %v167 = vld [vmem:[#allocation5 + $0x120] sm:$0xff]
    %v168 = vld [vmem:[#allocation5 + $0x128] sm:$0xff]
    %v169 = vld [vmem:[#allocation5 + $0x130] sm:$0xff]
    %v170 = vld [vmem:[#allocation5 + $0x138] sm:$0xff]
    %v171 = vld [vmem:[#allocation5 + $0x140] sm:$0xff]
    %v172 = vld [vmem:[#allocation5 + $0x148] sm:$0xff]
    %v173 = vld [vmem:[#allocation5 + $0x150] sm:$0xff]
    %v174 = vld [vmem:[#allocation5 + $0x158] sm:$0xff]
    %v175 = vld [vmem:[#allocation5 + $0x160] sm:$0xff]
    %v176 = vld [vmem:[#allocation5 + $0x168] sm:$0xff]
    %v177 = vld [vmem:[#allocation5 + $0x170] sm:$0xff]
    %v178 = vld [vmem:[#allocation5 + $0x178] sm:$0xff]
    %v179 = vld [vmem:[#allocation5 + $0x180] sm:$0xff]
    %v180 = vld [vmem:[#allocation5 + $0x188] sm:$0xff]
    %v181 = vld [vmem:[#allocation5 + $0x190] sm:$0xff]
    %v182 = vld [vmem:[#allocation5 + $0x198] sm:$0xff]
    %v183 = vld [vmem:[#allocation5 + $0x1a0] sm:$0xff]
    %v184 = vld [vmem:[#allocation5 + $0x1a8] sm:$0xff]
    %v185 = vld [vmem:[#allocation5 + $0x1b0] sm:$0xff]
    %v186 = vld [vmem:[#allocation5 + $0x1b8] sm:$0xff]
    %v187 = vld [vmem:[#allocation5 + $0x1c0] sm:$0xff]
    %v188 = vld [vmem:[#allocation5 + $0x1c8] sm:$0xff]
    %v189 = vld [vmem:[#allocation5 + $0x1d0] sm:$0xff]
    %v190 = vld [vmem:[#allocation5 + $0x1d8] sm:$0xff]
    %v191 = vld [vmem:[#allocation5 + $0x1e0] sm:$0xff]
    %v192 = vld [vmem:[#allocation5 + $0x1e8] sm:$0xff]
    %v193 = vld [vmem:[#allocation5 + $0x1f0] sm:$0xff]
    %v194 = vld [vmem:[#allocation5 + $0x1f8] sm:$0xff]
    %v195 = vld [vmem:[#allocation5 + $0x200] sm:$0xff]
    %v196 = vld [vmem:[#allocation5 + $0x208] sm:$0xff]
    %v197 = vld [vmem:[#allocation5 + $0x210] sm:$0xff]
    %v198 = vld [vmem:[#allocation5 + $0x218] sm:$0xff]
    %v199 = vld [vmem:[#allocation5 + $0x220] sm:$0xff]
    %v200 = vld [vmem:[#allocation5 + $0x228] sm:$0xff]
    %v201 = vld [vmem:[#allocation5 + $0x230] sm:$0xff]
    %v202 = vld [vmem:[#allocation5 + $0x238] sm:$0xff]
    %v203 = vld [vmem:[#allocation5 + $0x240] sm:$0xff]
    %v204 = vld [vmem:[#allocation5 + $0x248] sm:$0xff]
    %v205 = vld [vmem:[#allocation5 + $0x250] sm:$0xff]
    %v206 = vld [vmem:[#allocation5 + $0x258] sm:$0xff]
    %v207 = vld [vmem:[#allocation5 + $0x260] sm:$0xff]
    %v208 = vld [vmem:[#allocation5 + $0x268] sm:$0xff]
    %v209 = vld [vmem:[#allocation5 + $0x270] sm:$0xff]
    %v210 = vld [vmem:[#allocation5 + $0x278] sm:$0xff]
    %v211 = vld [vmem:[#allocation5 + $0x280] sm:$0xff]
    %v212 = vld [vmem:[#allocation5 + $0x288] sm:$0xff]
    %v213 = vld [vmem:[#allocation5 + $0x290] sm:$0xff]
    %v214 = vld [vmem:[#allocation5 + $0x298] sm:$0xff]
    %v215 = vld [vmem:[#allocation5 + $0x2a0] sm:$0xff]
    %v216 = vld [vmem:[#allocation5 + $0x2a8] sm:$0xff]
    %v217 = vld [vmem:[#allocation5 + $0x2b0] sm:$0xff]
    %v218 = vld [vmem:[#allocation5 + $0x2b8] sm:$0xff]
    %v219 = vld [vmem:[#allocation5 + $0x2c0] sm:$0xff]
    %v220 = vld [vmem:[#allocation5 + $0x2c8] sm:$0xff]
    %v221 = vld [vmem:[#allocation5 + $0x2d0] sm:$0xff]
    %v222 = vld [vmem:[#allocation5 + $0x2d8] sm:$0xff]
    %v223 = vld [vmem:[#allocation5 + $0x2e0] sm:$0xff]
    %v224 = vld [vmem:[#allocation5 + $0x2e8] sm:$0xff]
    %v225 = vld [vmem:[#allocation5 + $0x2f0] sm:$0xff]
    %v226 = vld [vmem:[#allocation5 + $0x2f8] sm:$0xff]
    %v227 = vld [vmem:[#allocation5 + $0x300] sm:$0xff]
    %v228 = vld [vmem:[#allocation5 + $0x308] sm:$0xff]
    %v229 = vld [vmem:[#allocation7] sm:$0x77]
    %v231 = vlaneseq
    %v232 = vshrl.u32 %v231, 7
    %v233 = vsub.s32 0, %v232
    %v234 = vrot.slane %v229, %v233
    %v235 = vlaneseq
    %v236 = vshrl.u32 %v235, 7
    %v237 = vsub.s32 4, %v236
    %v238 = vrot.slane %v229, %v237
    %v241 = vlaneseq
    %v242 = vshrl.u32 %v241, 7
    %v243 = vsub.s32 0, %v242
    %v244 = vrot.slane %v234, %v243
    %v245 = vlaneseq
    %v246 = vshrl.u32 %v245, 7
    %v247 = vsub.s32 0, %v246
    %v248 = vrot.slane %v238, %v247
    %v347 = vunpack.c.l.b16 %v131
    %v348 = vunpack.c.h.b16 %v131
    %v349 = vunpack.c.l.b16 %v132
    %v350 = vunpack.c.h.b16 %v132
    %v351 = vunpack.c.l.b16 %v133
    %v352 = vunpack.c.h.b16 %v133
    %v353 = vunpack.c.l.b16 %v134
    %v354 = vunpack.c.h.b16 %v134
    %v355 = vunpack.c.l.b16 %v135
    %v356 = vunpack.c.h.b16 %v135
    %v357 = vunpack.c.l.b16 %v136
    %v358 = vunpack.c.h.b16 %v136
    %v359 = vunpack.c.l.b16 %v137
    %v360 = vunpack.c.h.b16 %v137
    %v361 = vunpack.c.l.b16 %v138
    %v362 = vunpack.c.h.b16 %v138
    %v363 = vunpack.c.l.b16 %v139
    %v364 = vunpack.c.h.b16 %v139
    %v365 = vunpack.c.l.b16 %v140
    %v366 = vunpack.c.h.b16 %v140
    %v367 = vunpack.c.l.b16 %v141
    %v368 = vunpack.c.h.b16 %v141
    %v369 = vunpack.c.l.b16 %v142
    %v370 = vunpack.c.h.b16 %v142
    %v371 = vunpack.c.l.b16 %v143
    %v372 = vunpack.c.h.b16 %v143
    %v373 = vunpack.c.l.b16 %v144
    %v374 = vunpack.c.h.b16 %v144
    %v375 = vunpack.c.l.b16 %v145
    %v376 = vunpack.c.h.b16 %v145
    %v377 = vunpack.c.l.b16 %v146
    %v378 = vunpack.c.h.b16 %v146
    %v379 = vunpack.c.l.b16 %v147
    %v380 = vunpack.c.h.b16 %v147
    %v381 = vunpack.c.l.b16 %v148
    %v382 = vunpack.c.h.b16 %v148
    %v383 = vunpack.c.l.b16 %v149
    %v384 = vunpack.c.h.b16 %v149
    %v385 = vunpack.c.l.b16 %v150
    %v386 = vunpack.c.h.b16 %v150
    %v387 = vunpack.c.l.b16 %v151
    %v388 = vunpack.c.h.b16 %v151
    %v389 = vunpack.c.l.b16 %v152
    %v390 = vunpack.c.h.b16 %v152
    %v391 = vunpack.c.l.b16 %v153
    %v392 = vunpack.c.h.b16 %v153
    %v393 = vunpack.c.l.b16 %v154
    %v394 = vunpack.c.h.b16 %v154
    %v395 = vunpack.c.l.b16 %v155
    %v396 = vunpack.c.h.b16 %v155
    %v397 = vunpack.c.l.b16 %v156
    %v398 = vunpack.c.h.b16 %v156
    %v399 = vunpack.c.l.b16 %v157
    %v400 = vunpack.c.h.b16 %v157
    %v401 = vunpack.c.l.b16 %v158
    %v402 = vunpack.c.h.b16 %v158
    %v403 = vunpack.c.l.b16 %v159
    %v404 = vunpack.c.h.b16 %v159
    %v405 = vunpack.c.l.b16 %v160
    %v406 = vunpack.c.h.b16 %v160
    %v407 = vunpack.c.l.b16 %v161
    %v408 = vunpack.c.h.b16 %v161
    %v409 = vunpack.c.l.b16 %v162
    %v410 = vunpack.c.h.b16 %v162
    %v411 = vunpack.c.l.b16 %v163
    %v412 = vunpack.c.h.b16 %v163
    %v413 = vunpack.c.l.b16 %v164
    %v414 = vunpack.c.h.b16 %v164
    %v415 = vunpack.c.l.b16 %v165
    %v416 = vunpack.c.h.b16 %v165
    %v417 = vunpack.c.l.b16 %v166
    %v418 = vunpack.c.h.b16 %v166
    %v419 = vunpack.c.l.b16 %v167
    %v420 = vunpack.c.h.b16 %v167
    %v421 = vunpack.c.l.b16 %v168
    %v422 = vunpack.c.h.b16 %v168
    %v423 = vunpack.c.l.b16 %v169
    %v424 = vunpack.c.h.b16 %v169
    %v425 = vunpack.c.l.b16 %v170
    %v426 = vunpack.c.h.b16 %v170
    %v427 = vunpack.c.l.b16 %v171
    %v428 = vunpack.c.h.b16 %v171
    %v429 = vunpack.c.l.b16 %v172
    %v430 = vunpack.c.h.b16 %v172
    %v431 = vunpack.c.l.b16 %v173
    %v432 = vunpack.c.h.b16 %v173
    %v433 = vunpack.c.l.b16 %v174
    %v434 = vunpack.c.h.b16 %v174
    %v435 = vunpack.c.l.b16 %v175
    %v436 = vunpack.c.h.b16 %v175
    %v437 = vunpack.c.l.b16 %v176
    %v438 = vunpack.c.h.b16 %v176
    %v439 = vunpack.c.l.b16 %v177
    %v440 = vunpack.c.h.b16 %v177
    %v441 = vunpack.c.l.b16 %v178
    %v442 = vunpack.c.h.b16 %v178
    %v443 = vunpack.c.l.b16 %v179
    %v444 = vunpack.c.h.b16 %v179
    %v445 = vunpack.c.l.b16 %v180
    %v446 = vunpack.c.h.b16 %v180
    %v447 = vunpack.c.l.b16 %v181
    %v448 = vunpack.c.h.b16 %v181
    %v449 = vunpack.c.l.b16 %v182
    %v450 = vunpack.c.h.b16 %v182
    %v451 = vunpack.c.l.b16 %v183
    %v452 = vunpack.c.h.b16 %v183
    %v453 = vunpack.c.l.b16 %v184
    %v454 = vunpack.c.h.b16 %v184
    %v455 = vunpack.c.l.b16 %v185
    %v456 = vunpack.c.h.b16 %v185
    %v457 = vunpack.c.l.b16 %v186
    %v458 = vunpack.c.h.b16 %v186
    %v459 = vunpack.c.l.b16 %v187
    %v460 = vunpack.c.h.b16 %v187
    %v461 = vunpack.c.l.b16 %v188
    %v462 = vunpack.c.h.b16 %v188
    %v463 = vunpack.c.l.b16 %v189
    %v464 = vunpack.c.h.b16 %v189
    %v465 = vunpack.c.l.b16 %v190
    %v466 = vunpack.c.h.b16 %v190
    %v467 = vunpack.c.l.b16 %v191
    %v468 = vunpack.c.h.b16 %v191
    %v469 = vunpack.c.l.b16 %v192
    %v470 = vunpack.c.h.b16 %v192
    %v471 = vunpack.c.l.b16 %v193
    %v472 = vunpack.c.h.b16 %v193
    %v473 = vunpack.c.l.b16 %v194
    %v474 = vunpack.c.h.b16 %v194
    %v475 = vunpack.c.l.b16 %v195
    %v476 = vunpack.c.h.b16 %v195
    %v477 = vunpack.c.l.b16 %v196
    %v478 = vunpack.c.h.b16 %v196
    %v479 = vunpack.c.l.b16 %v197
    %v480 = vunpack.c.h.b16 %v197
    %v481 = vunpack.c.l.b16 %v198
    %v482 = vunpack.c.h.b16 %v198
    %v483 = vunpack.c.l.b16 %v199
    %v484 = vunpack.c.h.b16 %v199
    %v485 = vunpack.c.l.b16 %v200
    %v486 = vunpack.c.h.b16 %v200
    %v487 = vunpack.c.l.b16 %v201
    %v488 = vunpack.c.h.b16 %v201
    %v489 = vunpack.c.l.b16 %v202
    %v490 = vunpack.c.h.b16 %v202
    %v491 = vunpack.c.l.b16 %v203
    %v492 = vunpack.c.h.b16 %v203
    %v493 = vunpack.c.l.b16 %v204
    %v494 = vunpack.c.h.b16 %v204
    %v495 = vunpack.c.l.b16 %v205
    %v496 = vunpack.c.h.b16 %v205
    %v497 = vunpack.c.l.b16 %v206
    %v498 = vunpack.c.h.b16 %v206
    %v499 = vunpack.c.l.b16 %v207
    %v500 = vunpack.c.h.b16 %v207
    %v501 = vunpack.c.l.b16 %v208
    %v502 = vunpack.c.h.b16 %v208
    %v503 = vunpack.c.l.b16 %v209
    %v504 = vunpack.c.h.b16 %v209
    %v505 = vunpack.c.l.b16 %v210
    %v506 = vunpack.c.h.b16 %v210
    %v507 = vunpack.c.l.b16 %v211
    %v508 = vunpack.c.h.b16 %v211
    %v509 = vunpack.c.l.b16 %v212
    %v510 = vunpack.c.h.b16 %v212
    %v511 = vunpack.c.l.b16 %v213
    %v512 = vunpack.c.h.b16 %v213
    %v513 = vunpack.c.l.b16 %v214
    %v514 = vunpack.c.h.b16 %v214
    %v515 = vunpack.c.l.b16 %v215
    %v516 = vunpack.c.h.b16 %v215
    %v517 = vunpack.c.l.b16 %v216
    %v518 = vunpack.c.h.b16 %v216
    %v519 = vunpack.c.l.b16 %v217
    %v520 = vunpack.c.h.b16 %v217
    %v521 = vunpack.c.l.b16 %v218
    %v522 = vunpack.c.h.b16 %v218
    %v523 = vunpack.c.l.b16 %v219
    %v524 = vunpack.c.h.b16 %v219
    %v525 = vunpack.c.l.b16 %v220
    %v526 = vunpack.c.h.b16 %v220
    %v527 = vunpack.c.l.b16 %v221
    %v528 = vunpack.c.h.b16 %v221
    %v529 = vunpack.c.l.b16 %v222
    %v530 = vunpack.c.h.b16 %v222
    %v531 = vunpack.c.l.b16 %v223
    %v532 = vunpack.c.h.b16 %v223
    %v533 = vunpack.c.l.b16 %v224
    %v534 = vunpack.c.h.b16 %v224
    %v535 = vunpack.c.l.b16 %v225
    %v536 = vunpack.c.h.b16 %v225
    %v537 = vunpack.c.l.b16 %v226
    %v538 = vunpack.c.h.b16 %v226
    %v539 = vunpack.c.l.b16 %v227
    %v540 = vunpack.c.h.b16 %v227
    %v541 = vunpack.c.l.b16 %v228
    %v542 = vunpack.c.h.b16 %v228
    %v543 = vpack.c.b16 %v349, %v347
    %v544 = vpack.c.b16 %v350, %v348
    %v545 = vpack.c.b16 %v353, %v351
    %v546 = vpack.c.b16 %v354, %v352
    %v547 = vpack.c.b16 %v357, %v355
    %v548 = vpack.c.b16 %v358, %v356
    %v549 = vpack.c.b16 %v361, %v359
    %v550 = vpack.c.b16 %v362, %v360
    %v551 = vpack.c.b16 %v365, %v363
    %v552 = vpack.c.b16 %v366, %v364
    %v553 = vpack.c.b16 %v369, %v367
    %v554 = vpack.c.b16 %v370, %v368
    %v555 = vpack.c.b16 %v373, %v371
    %v556 = vpack.c.b16 %v374, %v372
    %v557 = vpack.c.b16 %v377, %v375
    %v558 = vpack.c.b16 %v378, %v376
    %v559 = vpack.c.b16 %v381, %v379
    %v560 = vpack.c.b16 %v382, %v380
    %v561 = vpack.c.b16 %v385, %v383
    %v562 = vpack.c.b16 %v386, %v384
    %v563 = vpack.c.b16 %v389, %v387
    %v564 = vpack.c.b16 %v390, %v388
    %v565 = vpack.c.b16 %v393, %v391
    %v566 = vpack.c.b16 %v394, %v392
    %v567 = vpack.c.b16 %v397, %v395
    %v568 = vpack.c.b16 %v398, %v396
    %v569 = vpack.c.b16 %v401, %v399
    %v570 = vpack.c.b16 %v402, %v400
    %v571 = vpack.c.b16 %v405, %v403
    %v572 = vpack.c.b16 %v406, %v404
    %v573 = vpack.c.b16 %v409, %v407
    %v574 = vpack.c.b16 %v410, %v408
    %v575 = vpack.c.b16 %v413, %v411
    %v576 = vpack.c.b16 %v414, %v412
    %v577 = vpack.c.b16 %v417, %v415
    %v578 = vpack.c.b16 %v418, %v416
    %v579 = vpack.c.b16 %v421, %v419
    %v580 = vpack.c.b16 %v422, %v420
    %v581 = vpack.c.b16 %v425, %v423
    %v582 = vpack.c.b16 %v426, %v424
    %v583 = vpack.c.b16 %v429, %v427
    %v584 = vpack.c.b16 %v430, %v428
    %v585 = vpack.c.b16 %v433, %v431
    %v586 = vpack.c.b16 %v434, %v432
    %v587 = vpack.c.b16 %v437, %v435
    %v588 = vpack.c.b16 %v438, %v436
    %v589 = vpack.c.b16 %v441, %v439
    %v590 = vpack.c.b16 %v442, %v440
    %v591 = vpack.c.b16 %v445, %v443
    %v592 = vpack.c.b16 %v446, %v444
    %v593 = vpack.c.b16 %v449, %v447
    %v594 = vpack.c.b16 %v450, %v448
    %v595 = vpack.c.b16 %v453, %v451
    %v596 = vpack.c.b16 %v454, %v452
    %v597 = vpack.c.b16 %v457, %v455
    %v598 = vpack.c.b16 %v458, %v456
    %v599 = vpack.c.b16 %v461, %v459
    %v600 = vpack.c.b16 %v462, %v460
    %v601 = vpack.c.b16 %v465, %v463
    %v602 = vpack.c.b16 %v466, %v464
    %v603 = vpack.c.b16 %v469, %v467
    %v604 = vpack.c.b16 %v470, %v468
    %v605 = vpack.c.b16 %v473, %v471
    %v606 = vpack.c.b16 %v474, %v472
    %v607 = vpack.c.b16 %v477, %v475
    %v608 = vpack.c.b16 %v478, %v476
    %v609 = vpack.c.b16 %v481, %v479
    %v610 = vpack.c.b16 %v482, %v480
    %v611 = vpack.c.b16 %v485, %v483
    %v612 = vpack.c.b16 %v486, %v484
    %v613 = vpack.c.b16 %v489, %v487
    %v614 = vpack.c.b16 %v490, %v488
    %v615 = vpack.c.b16 %v493, %v491
    %v616 = vpack.c.b16 %v494, %v492
    %v617 = vpack.c.b16 %v497, %v495
    %v618 = vpack.c.b16 %v498, %v496
    %v619 = vpack.c.b16 %v501, %v499
    %v620 = vpack.c.b16 %v502, %v500
    %v621 = vpack.c.b16 %v505, %v503
    %v622 = vpack.c.b16 %v506, %v504
    %v623 = vpack.c.b16 %v509, %v507
    %v624 = vpack.c.b16 %v510, %v508
    %v625 = vpack.c.b16 %v513, %v511
    %v626 = vpack.c.b16 %v514, %v512
    %v627 = vpack.c.b16 %v517, %v515
    %v628 = vpack.c.b16 %v518, %v516
    %v629 = vpack.c.b16 %v521, %v519
    %v630 = vpack.c.b16 %v522, %v520
    %v631 = vpack.c.b16 %v525, %v523
    %v632 = vpack.c.b16 %v526, %v524
    %v633 = vpack.c.b16 %v529, %v527
    %v634 = vpack.c.b16 %v530, %v528
    %v635 = vpack.c.b16 %v533, %v531
    %v636 = vpack.c.b16 %v534, %v532
    %v637 = vpack.c.b16 %v537, %v535
    %v638 = vpack.c.b16 %v538, %v536
    %v639 = vpack.c.b16 %v541, %v539
    %v640 = vpack.c.b16 %v542, %v540
    %vm739 = vcmask 130048
    %v741 = vsel %vm739, %v130, 0
    %743 = vmatprep.subr.bf16.mxu0 %v544
    %744 = vmatpush1.bf16.msra.mxu0 %v543
    %745 = vmatprep.subr.bf16.mxu0 %v546
    %746 = vmatpush1.bf16.msra.mxu0 %v545
    %747 = vmatprep.subr.bf16.mxu0 %v548
    %748 = vmatpush1.bf16.msra.mxu0 %v547
    %749 = vmatprep.subr.bf16.mxu0 %v550
    %750 = vmatpush1.bf16.msra.mxu0 %v549
    %751 = vmatprep.subr.bf16.mxu0 %v552
    %752 = vmatpush1.bf16.msra.mxu0 %v551
    %753 = vmatprep.subr.bf16.mxu0 %v554
    %754 = vmatpush1.bf16.msra.mxu0 %v553
    %755 = vmatprep.subr.bf16.mxu0 %v556
    %756 = vmatpush1.bf16.msra.mxu0 %v555
    %757 = vmatprep.subr.bf16.mxu0 %v558
    %758 = vmatpush1.bf16.msra.mxu0 %v557
    %759 = vmatprep.subr.bf16.mxu0 %v560
    %760 = vmatpush1.bf16.msra.mxu0 %v559
    %761 = vmatprep.subr.bf16.mxu0 %v562
    %762 = vmatpush1.bf16.msra.mxu0 %v561
    %763 = vmatprep.subr.bf16.mxu0 %v564
    %764 = vmatpush1.bf16.msra.mxu0 %v563
    %765 = vmatprep.subr.bf16.mxu0 %v566
    %766 = vmatpush1.bf16.msra.mxu0 %v565
    %767 = vmatprep.subr.bf16.mxu0 %v568
    %768 = vmatpush1.bf16.msra.mxu0 %v567
    %769 = vmatprep.subr.bf16.mxu0 %v570
    %770 = vmatpush1.bf16.msra.mxu0 %v569
    %771 = vmatprep.subr.bf16.mxu0 %v572
    %772 = vmatpush1.bf16.msra.mxu0 %v571
    %773 = vmatprep.subr.bf16.mxu0 %v574
    %774 = vmatpush1.bf16.msra.mxu0 %v573
    %775 = vmatprep.mubr.bf16.mxu0 %v125
    %776 = vmatmul.mubr.bf16.gmra.mrb[0].mxu0 %v124
    %v777 = vpop.f32.mrb[0].mxu0
    %v778 = vadd.f32 %v244, %v777
    %v779 = vpop.f32.mrb[0].mxu0
    %v780 = vadd.f32 %v248, %v779
    %v781 = vpop.f32.mrb[0].mxu0
    %v782 = vpop.f32.mrb[0].mxu0
    %783 = vdwg.mxu0
    %784 = vmatprep.subr.bf16.mxu0 %v576
    %785 = vmatpush1.bf16.msra.mxu0 %v575
    %786 = vmatprep.subr.bf16.mxu0 %v578
    %787 = vmatpush1.bf16.msra.mxu0 %v577
    %788 = vmatprep.subr.bf16.mxu0 %v580
    %789 = vmatpush1.bf16.msra.mxu0 %v579
    %790 = vmatprep.subr.bf16.mxu0 %v582
    %791 = vmatpush1.bf16.msra.mxu0 %v581
    %792 = vmatprep.subr.bf16.mxu0 %v584
    %793 = vmatpush1.bf16.msra.mxu0 %v583
    %794 = vmatprep.subr.bf16.mxu0 %v586
    %795 = vmatpush1.bf16.msra.mxu0 %v585
    %796 = vmatprep.subr.bf16.mxu0 %v588
    %797 = vmatpush1.bf16.msra.mxu0 %v587
    %798 = vmatprep.subr.bf16.mxu0 %v590
    %799 = vmatpush1.bf16.msra.mxu0 %v589
    %800 = vmatprep.subr.bf16.mxu0 %v592
    %801 = vmatpush1.bf16.msra.mxu0 %v591
    %802 = vmatprep.subr.bf16.mxu0 %v594
    %803 = vmatpush1.bf16.msra.mxu0 %v593
    %804 = vmatprep.subr.bf16.mxu0 %v596
    %805 = vmatpush1.bf16.msra.mxu0 %v595
    %806 = vmatprep.subr.bf16.mxu0 %v598
    %807 = vmatpush1.bf16.msra.mxu0 %v597
    %808 = vmatprep.subr.bf16.mxu0 %v600
    %809 = vmatpush1.bf16.msra.mxu0 %v599
    %810 = vmatprep.subr.bf16.mxu0 %v602
    %811 = vmatpush1.bf16.msra.mxu0 %v601
    %812 = vmatprep.subr.bf16.mxu0 %v604
    %813 = vmatpush1.bf16.msra.mxu0 %v603
    %814 = vmatprep.subr.bf16.mxu0 %v606
    %815 = vmatpush1.bf16.msra.mxu0 %v605
    %816 = vmatprep.mubr.bf16.mxu0 %v127
    %817 = vmatmul.mubr.bf16.gmra.mrb[0].mxu0 %v126
    %v818 = vpop.f32.mrb[0].mxu0
    %v819 = vadd.f32 %v778, %v818
    %v820 = vpop.f32.mrb[0].mxu0
    %v821 = vadd.f32 %v780, %v820
    %v822 = vpop.f32.mrb[0].mxu0
    %v823 = vpop.f32.mrb[0].mxu0
    %824 = vdwg.mxu0
    %825 = vmatprep.subr.bf16.mxu0 %v608
    %826 = vmatpush1.bf16.msra.mxu0 %v607
    %827 = vmatprep.subr.bf16.mxu0 %v610
    %828 = vmatpush1.bf16.msra.mxu0 %v609
    %829 = vmatprep.subr.bf16.mxu0 %v612
    %830 = vmatpush1.bf16.msra.mxu0 %v611
    %831 = vmatprep.subr.bf16.mxu0 %v614
    %832 = vmatpush1.bf16.msra.mxu0 %v613
    %833 = vmatprep.subr.bf16.mxu0 %v616
    %834 = vmatpush1.bf16.msra.mxu0 %v615
    %835 = vmatprep.subr.bf16.mxu0 %v618
    %836 = vmatpush1.bf16.msra.mxu0 %v617
    %837 = vmatprep.subr.bf16.mxu0 %v620
    %838 = vmatpush1.bf16.msra.mxu0 %v619
    %839 = vmatprep.subr.bf16.mxu0 %v622
    %840 = vmatpush1.bf16.msra.mxu0 %v621
    %841 = vmatprep.subr.bf16.mxu0 %v624
    %842 = vmatpush1.bf16.msra.mxu0 %v623
    %843 = vmatprep.subr.bf16.mxu0 %v626
    %844 = vmatpush1.bf16.msra.mxu0 %v625
    %845 = vmatprep.subr.bf16.mxu0 %v628
    %846 = vmatpush1.bf16.msra.mxu0 %v627
    %847 = vmatprep.subr.bf16.mxu0 %v630
    %848 = vmatpush1.bf16.msra.mxu0 %v629
    %849 = vmatprep.subr.bf16.mxu0 %v632
    %850 = vmatpush1.bf16.msra.mxu0 %v631
    %851 = vmatprep.subr.bf16.mxu0 %v634
    %852 = vmatpush1.bf16.msra.mxu0 %v633
    %853 = vmatprep.subr.bf16.mxu0 %v636
    %854 = vmatpush1.bf16.msra.mxu0 %v635
    %855 = vmatprep.subr.bf16.mxu0 %v638
    %856 = vmatpush1.bf16.msra.mxu0 %v637
    %857 = vmatprep.mubr.bf16.mxu0 %v129
    %858 = vmatmul.mubr.bf16.gmra.mrb[0].mxu0 %v128
    %v859 = vpop.f32.mrb[0].mxu0
    %v860 = vadd.f32 %v819, %v859
    %v861 = vpop.f32.mrb[0].mxu0
    %v862 = vadd.f32 %v821, %v861
    %v863 = vpop.f32.mrb[0].mxu0
    %v864 = vpop.f32.mrb[0].mxu0
    %865 = vdwg.mxu0
    %866 = vmatprep.subr.bf16.mxu0 %v640
    %867 = vmatpush1.bf16.msra.mxu0 %v639
    %868 = vmatprep.subr.bf16.mxu0 0
    %869 = vmatpush1.bf16.msra.mxu0 0
    %870 = vmatprep.subr.bf16.mxu0 0
    %871 = vmatpush1.bf16.msra.mxu0 0
    %872 = vmatprep.subr.bf16.mxu0 0
    %873 = vmatpush1.bf16.msra.mxu0 0
    %874 = vmatprep.subr.bf16.mxu0 0
    %875 = vmatpush1.bf16.msra.mxu0 0
    %876 = vmatprep.subr.bf16.mxu0 0
    %877 = vmatpush1.bf16.msra.mxu0 0
    %878 = vmatprep.subr.bf16.mxu0 0
    %879 = vmatpush1.bf16.msra.mxu0 0
    %880 = vmatprep.subr.bf16.mxu0 0
    %881 = vmatpush1.bf16.msra.mxu0 0
    %882 = vmatprep.subr.bf16.mxu0 0
    %883 = vmatpush1.bf16.msra.mxu0 0
    %884 = vmatprep.subr.bf16.mxu0 0
    %885 = vmatpush1.bf16.msra.mxu0 0
    %886 = vmatprep.subr.bf16.mxu0 0
    %887 = vmatpush1.bf16.msra.mxu0 0
    %888 = vmatprep.subr.bf16.mxu0 0
    %889 = vmatpush1.bf16.msra.mxu0 0
    %890 = vmatprep.subr.bf16.mxu0 0
    %891 = vmatpush1.bf16.msra.mxu0 0
    %892 = vmatprep.subr.bf16.mxu0 0
    %893 = vmatpush1.bf16.msra.mxu0 0
    %894 = vmatprep.subr.bf16.mxu0 0
    %895 = vmatpush1.bf16.msra.mxu0 0
    %896 = vmatprep.subr.bf16.mxu0 0
    %897 = vmatpush1.bf16.msra.mxu0 0
    %898 = vmatprep.mubr.bf16.mxu0 0
    %899 = vmatmul.mubr.bf16.gmra.mrb[0].mxu0 %v741
    %v900 = vpop.f32.mrb[0].mxu0
    %v901 = vadd.f32 %v860, %v900
    %v902 = vpop.f32.mrb[0].mxu0
    %v903 = vadd.f32 %v862, %v902
    %v904 = vpop.f32.mrb[0].mxu0
    %v905 = vpop.f32.mrb[0].mxu0
    %906 = vdwg.mxu0
    %v907 = vmul.f32 %v901, 0.5
    %v908 = vmul.f32 %v903, 0.5
    %v909 = vmul.f32 %v901, 0.70710677
    %v910 = vmul.f32 %v903, 0.70710677
    %v911 = verf.f32.pop %v909
    %v912 = verf.f32.pop %v910
    %v913 = vadd.f32 %v911, 1.0
    %v914 = vadd.f32 %v912, 1.0
    %v915 = vmul.f32 %v907, %v913
    %v916 = vmul.f32 %v908, %v914
    %v917 = vlaneseq
    %v918 = vshrl.u32 %v917, 7
    %v919 = vsub.s32 1, %v918
    %v920 = vrot.slane %v229, %v919
    %v921 = vlaneseq
    %v922 = vshrl.u32 %v921, 7
    %v923 = vsub.s32 5, %v922
    %v924 = vrot.slane %v229, %v923
    %v927 = vlaneseq
    %v928 = vshrl.u32 %v927, 7
    %v929 = vsub.s32 1, %v928
    %v930 = vrot.slane %v920, %v929
    %v931 = vlaneseq
    %v932 = vshrl.u32 %v931, 7
    %v933 = vsub.s32 1, %v932
    %v934 = vrot.slane %v924, %v933
    %v935 = vmul.f32 %v915, %v930
    %v936 = vmul.f32 %v916, %v934
    %v937 = vlaneseq
    %v938 = vshrl.u32 %v937, 7
    %v939 = vsub.s32 2, %v938
    %v940 = vrot.slane %v229, %v939
    %v941 = vlaneseq
    %v942 = vshrl.u32 %v941, 7
    %v943 = vsub.s32 6, %v942
    %v944 = vrot.slane %v229, %v943
    %v947 = vlaneseq
    %v948 = vshrl.u32 %v947, 7
    %v949 = vsub.s32 2, %v948
    %v950 = vrot.slane %v940, %v949
    %v951 = vlaneseq
    %v952 = vshrl.u32 %v951, 7
    %v953 = vsub.s32 2, %v952
    %v954 = vrot.slane %v944, %v953
    %v955 = vadd.f32 %v935, %v950
    %v956 = vadd.f32 %v936, %v954
    %v957 = vpack.c.bf16 %v955, %v955
    %v958 = vpack.c.bf16 %v956, %v956
    %v961 = vunpack.c.l.b16 %v957
    %v962 = vunpack.c.l.b16 %v958
    %v963 = vpack.c.b16 %v962, %v961
    %965 = vst [vmem:[#allocation13] sm:$0xff] %v963
    %v966 = vld [vmem:[#allocation8] sm:$0xf]
    %v967 = vld [vmem:[#allocation8 + $0x4] sm:$0xf]
    %v968 = vld [vmem:[#allocation8 + $0x8] sm:$0xf]
    %v969 = vld [vmem:[#allocation8 + $0xc] sm:$0xf]
    %v970 = vld [vmem:[#allocation8 + $0x10] sm:$0xf]
    %v971 = vld [vmem:[#allocation8 + $0x14] sm:$0xf]
    %v972 = vld [vmem:[#allocation8 + $0x18] sm:$0xf]
    %v973 = vld [vmem:[#allocation8 + $0x1c] sm:$0xf]
    %v974 = vld [vmem:[#allocation8 + $0x20] sm:$0xf]
    %v975 = vld [vmem:[#allocation8 + $0x24] sm:$0xf]
    %v976 = vld [vmem:[#allocation8 + $0x28] sm:$0xf]
    %v977 = vld [vmem:[#allocation8 + $0x2c] sm:$0xf]
    %v978 = vld [vmem:[#allocation8 + $0x30] sm:$0xf]
    %v979 = vld [vmem:[#allocation8 + $0x34] sm:$0xf]
    %v980 = vld [vmem:[#allocation8 + $0x38] sm:$0xf]
    %v981 = vld [vmem:[#allocation8 + $0x3c] sm:$0xf]
    %v982 = vld [vmem:[#allocation8 + $0x40] sm:$0xf]
    %v983 = vld [vmem:[#allocation8 + $0x44] sm:$0xf]
    %v984 = vld [vmem:[#allocation8 + $0x48] sm:$0xf]
    %v985 = vld [vmem:[#allocation8 + $0x4c] sm:$0xf]
    %v986 = vld [vmem:[#allocation8 + $0x50] sm:$0xf]
    %v987 = vld [vmem:[#allocation8 + $0x54] sm:$0xf]
    %v988 = vld [vmem:[#allocation8 + $0x58] sm:$0xf]
    %v989 = vld [vmem:[#allocation8 + $0x5c] sm:$0xf]
    %v990 = vld [vmem:[#allocation8 + $0x60] sm:$0xf]
    %v991 = vld [vmem:[#allocation8 + $0x64] sm:$0xf]
    %v992 = vld [vmem:[#allocation8 + $0x68] sm:$0xf]
    %v993 = vld [vmem:[#allocation8 + $0x6c] sm:$0xf]
    %v994 = vld [vmem:[#allocation8 + $0x70] sm:$0xf]
    %v995 = vld [vmem:[#allocation8 + $0x74] sm:$0xf]
    %v996 = vld [vmem:[#allocation8 + $0x78] sm:$0xf]
    %v997 = vld [vmem:[#allocation8 + $0x7c] sm:$0xf]
    %v998 = vld [vmem:[%s4] sm:$0x7]
    %v999 = vlaneseq
    %v1000 = vshrl.u32 %v999, 7
    %v1001 = vsub.s32 0, %v1000
    %v1002 = vrot.slane %v998, %v1001
    %v1035 = vunpack.c.l.b16 %v966
    %v1036 = vunpack.c.l.b16 %v967
    %v1037 = vunpack.c.l.b16 %v968
    %v1038 = vunpack.c.l.b16 %v969
    %v1039 = vunpack.c.l.b16 %v970
    %v1040 = vunpack.c.l.b16 %v971
    %v1041 = vunpack.c.l.b16 %v972
    %v1042 = vunpack.c.l.b16 %v973
    %v1043 = vunpack.c.l.b16 %v974
    %v1044 = vunpack.c.l.b16 %v975
    %v1045 = vunpack.c.l.b16 %v976
    %v1046 = vunpack.c.l.b16 %v977
    %v1047 = vunpack.c.l.b16 %v978
    %v1048 = vunpack.c.l.b16 %v979
    %v1049 = vunpack.c.l.b16 %v980
    %v1050 = vunpack.c.l.b16 %v981
    %v1051 = vunpack.c.l.b16 %v982
    %v1052 = vunpack.c.l.b16 %v983
    %v1053 = vunpack.c.l.b16 %v984
    %v1054 = vunpack.c.l.b16 %v985
    %v1055 = vunpack.c.l.b16 %v986
    %v1056 = vunpack.c.l.b16 %v987
    %v1057 = vunpack.c.l.b16 %v988
    %v1058 = vunpack.c.l.b16 %v989
    %v1059 = vunpack.c.l.b16 %v990
    %v1060 = vunpack.c.l.b16 %v991
    %v1061 = vunpack.c.l.b16 %v992
    %v1062 = vunpack.c.l.b16 %v993
    %v1063 = vunpack.c.l.b16 %v994
    %v1064 = vunpack.c.l.b16 %v995
    %v1065 = vunpack.c.l.b16 %v996
    %v1066 = vunpack.c.l.b16 %v997
    %v1067 = vpack.c.b16 %v1036, %v1035
    %v1068 = vpack.c.b16 %v1038, %v1037
    %v1069 = vpack.c.b16 %v1040, %v1039
    %v1070 = vpack.c.b16 %v1042, %v1041
    %v1071 = vpack.c.b16 %v1044, %v1043
    %v1072 = vpack.c.b16 %v1046, %v1045
    %v1073 = vpack.c.b16 %v1048, %v1047
    %v1074 = vpack.c.b16 %v1050, %v1049
    %v1075 = vpack.c.b16 %v1052, %v1051
    %v1076 = vpack.c.b16 %v1054, %v1053
    %v1077 = vpack.c.b16 %v1056, %v1055
    %v1078 = vpack.c.b16 %v1058, %v1057
    %v1079 = vpack.c.b16 %v1060, %v1059
    %v1080 = vpack.c.b16 %v1062, %v1061
    %v1081 = vpack.c.b16 %v1064, %v1063
    %v1082 = vpack.c.b16 %v1066, %v1065
    %1099 = vmatprep.subr.bf16.mxu0 0
    %1100 = vmatpush1.bf16.msra.mxu0 %v1067
    %1101 = vmatprep.subr.bf16.mxu0 0
    %1102 = vmatpush1.bf16.msra.mxu0 %v1068
    %1103 = vmatprep.subr.bf16.mxu0 0
    %1104 = vmatpush1.bf16.msra.mxu0 %v1069
    %1105 = vmatprep.subr.bf16.mxu0 0
    %1106 = vmatpush1.bf16.msra.mxu0 %v1070
    %1107 = vmatprep.subr.bf16.mxu0 0
    %1108 = vmatpush1.bf16.msra.mxu0 %v1071
    %1109 = vmatprep.subr.bf16.mxu0 0
    %1110 = vmatpush1.bf16.msra.mxu0 %v1072
    %1111 = vmatprep.subr.bf16.mxu0 0
    %1112 = vmatpush1.bf16.msra.mxu0 %v1073
    %1113 = vmatprep.subr.bf16.mxu0 0
    %1114 = vmatpush1.bf16.msra.mxu0 %v1074
    %1115 = vmatprep.subr.bf16.mxu0 0
    %1116 = vmatpush1.bf16.msra.mxu0 %v1075
    %1117 = vmatprep.subr.bf16.mxu0 0
    %1118 = vmatpush1.bf16.msra.mxu0 %v1076
    %1119 = vmatprep.subr.bf16.mxu0 0
    %1120 = vmatpush1.bf16.msra.mxu0 %v1077
    %1121 = vmatprep.subr.bf16.mxu0 0
    %1122 = vmatpush1.bf16.msra.mxu0 %v1078
    %1123 = vmatprep.subr.bf16.mxu0 0
    %1124 = vmatpush1.bf16.msra.mxu0 %v1079
    %1125 = vmatprep.subr.bf16.mxu0 0
    %1126 = vmatpush1.bf16.msra.mxu0 %v1080
    %1127 = vmatprep.subr.bf16.mxu0 0
    %1128 = vmatpush1.bf16.msra.mxu0 %v1081
    %1129 = vmatprep.subr.bf16.mxu0 0
    %1130 = vmatpush1.bf16.msra.mxu0 %v1082
    %1131 = vmatprep.mubr.bf16.mxu0 %v958
    %1132 = vmatmul.mubr.bf16.gmra.mrb[0].mxu0 %v957
    %v1133 = vpop.f32.mrb[0].mxu0
    %v1134 = vadd.f32 %v1002, %v1133
    %v1135 = vpop.f32.mrb[0].mxu0
    %v1136 = vpop.f32.mrb[0].mxu0
    %v1137 = vpop.f32.mrb[0].mxu0
    %1138 = vdwg.mxu0
    %v1139 = vmul.f32 %v1134, 0.5
    %v1140 = vmul.f32 %v1134, 0.70710677
    %v1141 = verf.f32.pop %v1140
    %v1142 = vadd.f32 %v1141, 1.0
    %v1143 = vmul.f32 %v1139, %v1142
    %v1144 = vlaneseq
    %v1145 = vshrl.u32 %v1144, 7
    %v1146 = vsub.s32 1, %v1145
    %v1147 = vrot.slane %v998, %v1146
    %v1148 = vmul.f32 %v1143, %v1147
    %v1149 = vlaneseq
    %v1150 = vshrl.u32 %v1149, 7
    %v1151 = vsub.s32 2, %v1150
    %v1152 = vrot.slane %v998, %v1151
    %v1153 = vadd.f32 %v1148, %v1152
    %v1154 = vpack.c.bf16 %v1153, %v1153
    %1155 = vst [vmem:[#allocation14] sm:$0xf] %v1154
    %v1156 = vld [vmem:[#allocation10] sm:$0xf]
    %v1157 = vld [vmem:[#allocation10 + $0x4] sm:$0xf]
    %v1158 = vld [vmem:[#allocation10 + $0x8] sm:$0xf]
    %v1159 = vld [vmem:[#allocation10 + $0xc] sm:$0xf]
    %v1160 = vld [vmem:[#allocation10 + $0x10] sm:$0xf]
    %v1161 = vld [vmem:[#allocation10 + $0x14] sm:$0xf]
    %v1162 = vld [vmem:[#allocation10 + $0x18] sm:$0xf]
    %v1163 = vld [vmem:[#allocation10 + $0x1c] sm:$0xf]
    %v1164 = vld [vmem:[#allocation10 + $0x20] sm:$0xf]
    %v1165 = vld [vmem:[#allocation10 + $0x24] sm:$0xf]
    %v1166 = vld [vmem:[#allocation10 + $0x28] sm:$0xf]
    %v1167 = vld [vmem:[#allocation10 + $0x2c] sm:$0xf]
    %v1168 = vld [vmem:[#allocation10 + $0x30] sm:$0xf]
    %v1169 = vld [vmem:[#allocation10 + $0x34] sm:$0xf]
    %v1170 = vld [vmem:[#allocation10 + $0x38] sm:$0xf]
    %v1171 = vld [vmem:[#allocation10 + $0x3c] sm:$0xf]
    %v1172 = vld [vmem:[%s6] sm:$0x7]
    %v1173 = vlaneseq
    %v1174 = vshrl.u32 %v1173, 7
    %v1175 = vsub.s32 0, %v1174
    %v1176 = vrot.slane %v1172, %v1175
    %v1193 = vunpack.c.l.b16 %v1156
    %v1194 = vunpack.c.l.b16 %v1157
    %v1195 = vunpack.c.l.b16 %v1158
    %v1196 = vunpack.c.l.b16 %v1159
    %v1197 = vunpack.c.l.b16 %v1160
    %v1198 = vunpack.c.l.b16 %v1161
    %v1199 = vunpack.c.l.b16 %v1162
    %v1200 = vunpack.c.l.b16 %v1163
    %v1201 = vunpack.c.l.b16 %v1164
    %v1202 = vunpack.c.l.b16 %v1165
    %v1203 = vunpack.c.l.b16 %v1166
    %v1204 = vunpack.c.l.b16 %v1167
    %v1205 = vunpack.c.l.b16 %v1168
    %v1206 = vunpack.c.l.b16 %v1169
    %v1207 = vunpack.c.l.b16 %v1170
    %v1208 = vunpack.c.l.b16 %v1171
    %v1209 = vpack.c.b16 %v1194, %v1193
    %v1210 = vpack.c.b16 %v1196, %v1195
    %v1211 = vpack.c.b16 %v1198, %v1197
    %v1212 = vpack.c.b16 %v1200, %v1199
    %v1213 = vpack.c.b16 %v1202, %v1201
    %v1214 = vpack.c.b16 %v1204, %v1203
    %v1215 = vpack.c.b16 %v1206, %v1205
    %v1216 = vpack.c.b16 %v1208, %v1207
    %1225 = vmatprep.subr.bf16.mxu0 0
    %1226 = vmatpush1.bf16.msra.mxu0 %v1209
    %1227 = vmatprep.subr.bf16.mxu0 0
    %1228 = vmatpush1.bf16.msra.mxu0 %v1210
    %1229 = vmatprep.subr.bf16.mxu0 0
    %1230 = vmatpush1.bf16.msra.mxu0 %v1211
    %1231 = vmatprep.subr.bf16.mxu0 0
    %1232 = vmatpush1.bf16.msra.mxu0 %v1212
    %1233 = vmatprep.subr.bf16.mxu0 0
    %1234 = vmatpush1.bf16.msra.mxu0 %v1213
    %1235 = vmatprep.subr.bf16.mxu0 0
    %1236 = vmatpush1.bf16.msra.mxu0 %v1214
    %1237 = vmatprep.subr.bf16.mxu0 0
    %1238 = vmatpush1.bf16.msra.mxu0 %v1215
    %1239 = vmatprep.subr.bf16.mxu0 0
    %1240 = vmatpush1.bf16.msra.mxu0 %v1216
    %1241 = vmatprep.subr.bf16.mxu0 0
    %1242 = vmatpush1.bf16.msra.mxu0 0
    %1243 = vmatprep.subr.bf16.mxu0 0
    %1244 = vmatpush1.bf16.msra.mxu0 0
    %1245 = vmatprep.subr.bf16.mxu0 0
    %1246 = vmatpush1.bf16.msra.mxu0 0
    %1247 = vmatprep.subr.bf16.mxu0 0
    %1248 = vmatpush1.bf16.msra.mxu0 0
    %1249 = vmatprep.subr.bf16.mxu0 0
    %1250 = vmatpush1.bf16.msra.mxu0 0
    %1251 = vmatprep.subr.bf16.mxu0 0
    %1252 = vmatpush1.bf16.msra.mxu0 0
    %1253 = vmatprep.subr.bf16.mxu0 0
    %1254 = vmatpush1.bf16.msra.mxu0 0
    %1255 = vmatprep.subr.bf16.mxu0 0
    %1256 = vmatpush1.bf16.msra.mxu0 0
    %1257 = vmatprep.mubr.bf16.mxu0 0
    %1258 = vmatmul.mubr.bf16.gmra.mrb[0].mxu0 %v1154
    %v1259 = vpop.f32.mrb[0].mxu0
    %v1260 = vadd.f32 %v1176, %v1259
    %v1261 = vpop.f32.mrb[0].mxu0
    %v1262 = vpop.f32.mrb[0].mxu0
    %v1263 = vpop.f32.mrb[0].mxu0
    %1264 = vdwg.mxu0
    %v1265 = vmul.f32 %v1260, 0.5
    %v1266 = vmul.f32 %v1260, 0.70710677
    %v1267 = verf.f32.pop %v1266
    %v1268 = vadd.f32 %v1267, 1.0
    %v1269 = vmul.f32 %v1265, %v1268
    %v1270 = vlaneseq
    %v1271 = vshrl.u32 %v1270, 7
    %v1272 = vsub.s32 1, %v1271
    %v1273 = vrot.slane %v1172, %v1272
    %v1274 = vmul.f32 %v1269, %v1273
    %v1275 = vlaneseq
    %v1276 = vshrl.u32 %v1275, 7
    %v1277 = vsub.s32 2, %v1276
    %v1278 = vrot.slane %v1172, %v1277
    %v1279 = vadd.f32 %v1274, %v1278
    %v1280 = vpack.c.bf16 %v1279, %v1279
    %1281 = vst [vmem:[#allocation16] sm:$0xf] %v1280
    %v1282 = vld [vmem:[#allocation11] sm:$0xf]
    %v1283 = vld [vmem:[#allocation11 + $0x4] sm:$0xf]
    %v1284 = vld [vmem:[#allocation11 + $0x8] sm:$0xf]
    %v1285 = vld [vmem:[#allocation11 + $0xc] sm:$0xf]
    %v1286 = vld [vmem:[#allocation11 + $0x10] sm:$0xf]
    %v1287 = vld [vmem:[#allocation11 + $0x14] sm:$0xf]
    %v1288 = vld [vmem:[#allocation11 + $0x18] sm:$0xf]
    %v1289 = vld [vmem:[#allocation11 + $0x1c] sm:$0xf]
    %v1290 = vld [vmem:[#allocation11 + $0x20] sm:$0xf]
    %v1291 = vld [vmem:[#allocation11 + $0x24] sm:$0xf]
    %v1292 = vld [vmem:[#allocation11 + $0x28] sm:$0xf]
    %v1293 = vld [vmem:[#allocation11 + $0x2c] sm:$0xf]
    %v1294 = vld [vmem:[#allocation11 + $0x30] sm:$0xf]
    %v1295 = vld [vmem:[#allocation11 + $0x34] sm:$0xf]
    %v1296 = vld [vmem:[#allocation11 + $0x38] sm:$0xf]
    %v1297 = vld [vmem:[#allocation11 + $0x3c] sm:$0xf]
    %v1298 = vld [vmem:[%s8] sm:$0x1]
    %v1300 = vlaneseq
    %v1301 = vshrl.u32 %v1300, 7
    %v1302 = vsub.s32 0, %v1301
    %v1303 = vrot.slane %v1298, %v1302
    %v1321 = vunpack.c.l.b16 %v1282
    %v1322 = vunpack.c.l.b16 %v1283
    %v1323 = vunpack.c.l.b16 %v1284
    %v1324 = vunpack.c.l.b16 %v1285
    %v1325 = vunpack.c.l.b16 %v1286
    %v1326 = vunpack.c.l.b16 %v1287
    %v1327 = vunpack.c.l.b16 %v1288
    %v1328 = vunpack.c.l.b16 %v1289
    %v1329 = vunpack.c.l.b16 %v1290
    %v1330 = vunpack.c.l.b16 %v1291
    %v1331 = vunpack.c.l.b16 %v1292
    %v1332 = vunpack.c.l.b16 %v1293
    %v1333 = vunpack.c.l.b16 %v1294
    %v1334 = vunpack.c.l.b16 %v1295
    %v1335 = vunpack.c.l.b16 %v1296
    %v1336 = vunpack.c.l.b16 %v1297
    %v1337 = vpack.c.b16 %v1322, %v1321
    %v1338 = vpack.c.b16 %v1324, %v1323
    %v1339 = vpack.c.b16 %v1326, %v1325
    %v1340 = vpack.c.b16 %v1328, %v1327
    %v1341 = vpack.c.b16 %v1330, %v1329
    %v1342 = vpack.c.b16 %v1332, %v1331
    %v1343 = vpack.c.b16 %v1334, %v1333
    %v1344 = vpack.c.b16 %v1336, %v1335
    %1353 = vmatprep.subr.bf16.mxu0 0
    %1354 = vmatpush1.bf16.msra.mxu0 %v1337
    %1355 = vmatprep.subr.bf16.mxu0 0
    %1356 = vmatpush1.bf16.msra.mxu0 %v1338
    %1357 = vmatprep.subr.bf16.mxu0 0
    %1358 = vmatpush1.bf16.msra.mxu0 %v1339
    %1359 = vmatprep.subr.bf16.mxu0 0
    %1360 = vmatpush1.bf16.msra.mxu0 %v1340
    %1361 = vmatprep.subr.bf16.mxu0 0
    %1362 = vmatpush1.bf16.msra.mxu0 %v1341
    %1363 = vmatprep.subr.bf16.mxu0 0
    %1364 = vmatpush1.bf16.msra.mxu0 %v1342
    %1365 = vmatprep.subr.bf16.mxu0 0
    %1366 = vmatpush1.bf16.msra.mxu0 %v1343
    %1367 = vmatprep.subr.bf16.mxu0 0
    %1368 = vmatpush1.bf16.msra.mxu0 %v1344
    %1369 = vmatprep.subr.bf16.mxu0 0
    %1370 = vmatpush1.bf16.msra.mxu0 0
    %1371 = vmatprep.subr.bf16.mxu0 0
    %1372 = vmatpush1.bf16.msra.mxu0 0
    %1373 = vmatprep.subr.bf16.mxu0 0
    %1374 = vmatpush1.bf16.msra.mxu0 0
    %1375 = vmatprep.subr.bf16.mxu0 0
    %1376 = vmatpush1.bf16.msra.mxu0 0
    %1377 = vmatprep.subr.bf16.mxu0 0
    %1378 = vmatpush1.bf16.msra.mxu0 0
    %1379 = vmatprep.subr.bf16.mxu0 0
    %1380 = vmatpush1.bf16.msra.mxu0 0
    %1381 = vmatprep.subr.bf16.mxu0 0
    %1382 = vmatpush1.bf16.msra.mxu0 0
    %1383 = vmatprep.subr.bf16.mxu0 0
    %1384 = vmatpush1.bf16.msra.mxu0 0
    %1385 = vmatprep.mubr.bf16.mxu0 0
    %1386 = vmatmul.mubr.bf16.gmra.mrb[0].mxu0 %v1280
    %v1387 = vpop.f32.mrb[0].mxu0
    %v1388 = vadd.f32 %v1303, %v1387
    %v1389 = vpop.f32.mrb[0].mxu0
    %v1390 = vpop.f32.mrb[0].mxu0
    %v1391 = vpop.f32.mrb[0].mxu0
    %1392 = vdwg.mxu0
    %v1393 = vmax.f32 %v1388, 0.0
    %1394 = vst [vmem:[%s12] sm:$0xff] %v1393
    // Predicated region
    $region62: #{mlp_forward.1} parent=1 // pred_check
      _
    $region63: #{mlp_forward.1} parent=1 // pred_check_branch
      %1396 = sbr.rel (0) target = $region65
    $region64: #{mlp_forward.1} parent=1 // pred_region
      %s1398 = ssub.s32 128, 128
      %1399 = vsyncadd [#allocation4], %s1398
      %s1401 = sshll.u32 [#allocation13], 4
      %s1402 = int_to_ptr.vmem [resolvable:$true] %s1401
      %1404 = dma.vmem_to_hbm [thread:$0]  %s1402, 128, %s9, [#allocation4]
    $region65: #{mlp_forward.1} parent=1 // pred_fallthru
      _
    // Predicated region
    $region66: #{mlp_forward.1} parent=1 // pred_check
      _
    $region67: #{mlp_forward.1} parent=1 // pred_check_branch
      %1406 = sbr.rel (0) target = $region69
    $region68: #{mlp_forward.1} parent=1 // pred_region
      %s1408 = ssub.s32 64, 64
      %1409 = vsyncadd [#allocation15], %s1408
      %s1411 = sshll.u32 [#allocation14], 4
      %s1412 = int_to_ptr.vmem [resolvable:$true] %s1411
      %1414 = dma.vmem_to_hbm [thread:$0]  %s1412, 64, %s10, [#allocation15]
    $region69: #{mlp_forward.1} parent=1 // pred_fallthru
      _
    // Predicated region
    $region70: #{mlp_forward.1} parent=1 // pred_check
      _
    $region71: #{mlp_forward.1} parent=1 // pred_check_branch
      %1416 = sbr.rel (0) target = $region73
    $region72: #{mlp_forward.1} parent=1 // pred_region
      %s1418 = ssub.s32 64, 64
      %1419 = vsyncadd [#allocation15], %s1418
      %s1421 = sshll.u32 [#allocation16], 4
      %s1422 = int_to_ptr.vmem [resolvable:$true] %s1421
      %1424 = dma.vmem_to_hbm [thread:$0]  %s1422, 64, %s11, [#allocation15]
    $region73: #{mlp_forward.1} parent=1 // pred_fallthru
      _
    // Predicated region
    $region74: #{mlp_forward.1} parent=1 // pred_check
      _
    $region75: #{mlp_forward.1} parent=1 // pred_check_branch
      %1426 = sbr.rel (0) target = $region77
    $region76: #{mlp_forward.1} parent=1 // pred_region
      _
    $region77: #{mlp_forward.1} parent=1 // pred_fallthru
      _
    // Predicated region
    $region78: #{mlp_forward.1} parent=1 // pred_check
      _
    $region79: #{mlp_forward.1} parent=1 // pred_check_branch
      %1428 = sbr.rel (0) target = $region81
    $region80: #{mlp_forward.1} parent=1 // pred_region
      %1429 = dma.done [#allocation4], 128
    $region81: #{mlp_forward.1} parent=1 // pred_fallthru
      _
    // Predicated region
    $region82: #{mlp_forward.1} parent=1 // pred_check
      _
    $region83: #{mlp_forward.1} parent=1 // pred_check_branch
      %1431 = sbr.rel (0) target = $region85
    $region84: #{mlp_forward.1} parent=1 // pred_region
      %1432 = dma.done [#allocation15], 64
    $region85: #{mlp_forward.1} parent=1 // pred_fallthru
      _
    // Predicated region
    $region86: #{mlp_forward.1} parent=1 // pred_check
      _
    $region87: #{mlp_forward.1} parent=1 // pred_check_branch
      %1434 = sbr.rel (0) target = $region89
    $region88: #{mlp_forward.1} parent=1 // pred_region
      %1435 = dma.done [#allocation15], 64
    $region89: #{mlp_forward.1} parent=1 // pred_fallthru
      _
    // Predicated region
    $region90: #{mlp_forward.1} parent=1 // pred_check
      _
    $region91: #{mlp_forward.1} parent=1 // pred_check_branch
      %1437 = sbr.rel (0) target = $region93
    $region92: #{mlp_forward.1} parent=1 // pred_region
      _
    $region93: #{mlp_forward.1} parent=1 // pred_fallthru
      _
    %1438 = vsyncpa [#allocation3], 1
    %1439 = vsyncpa [#allocation6], 1
    %1440 = vsyncpa [#allocation9], 1
    %1441 = vsyncpa [#allocation12], 1
    %1442 = vsyncpa [#allocation4], 1
    %1443 = vsyncpa [#allocation15], 1

</llo_original>
